<compile_context>
chip_gen: v7x
topology: tpu7x:2x2x1
jax: 0.10.0
libtpu: 0.0.40
codegen_flags: <defaults>
</compile_context>

<pallas_src>
import functools

import jax
import jax.numpy as jnp
from jax.experimental import pallas as pl
from jax.experimental.pallas import tpu as pltpu

C = 56                     # channels at the attention block (EffNet-B4 block 3 input)
DROP_RATE = 0.4            # tf_efficientnet_b4_ns drop_rate (F.dropout in forward)

# rows of the packed small-parameter tensor handed to the kernel
_ROW_FC_B = 0              # SE 1x1-conv bias                         (C,)
_ROW_DW0 = 1               # depthwise 3x3 taps, rows 1..9            (C,) each
_ROW_PW_W = 10             # pointwise C->1 weight                    (C,)
_ROW_BIAS = 11             # [sum_c pw*dwb + pwb, 0, ...]             (C,)
_N_ROWS = 12


# -----------------------------------------------------------------------------
# Kernel: fused ECA (EffectiveSEModule) + SeparableConv2d + sigmoid + mask-mul
#         + global-average-pool of the masked features.
# -----------------------------------------------------------------------------
def _attention_kernel(x_ref, fcw_ref, prm_ref, mask_ref, pool_ref, pad_ref,
                      *, H, W, Cc, bb):
    x = x_ref[...]                                            # (bb, H, W, C) NHWC
    inv_hw = 1.0 / (H * W)

    # ---- EffectiveSEModule(56): global mean pool -> 1x1 conv -> hard_sigmoid
    pooled_x = jnp.sum(jnp.sum(x, axis=1), axis=1) * inv_hw   # (bb, C)
    se = jnp.dot(pooled_x, fcw_ref[...],
                 preferred_element_type=jnp.float32) + prm_ref[_ROW_FC_B]
    gate = jnp.clip(se + 3.0, 0.0, 6.0) * (1.0 / 6.0)         # hard_sigmoid, (bb, C)

    # ---- SeparableConv2d(56, 1) on the SE-gated features with the gate folded
    # into the pointwise weight (depthwise conv is per-channel linear, gate is
    # spatially constant), so the gated tensor is never materialized:
    #   logit = sum_c (pw[c]*gate[c]) * DW3x3(x)[c] + (sum_c pw[c]*dwb[c] + pwb)
    # Zero padding for the 3x3 conv lives only in a VMEM scratch.
    pad_ref[...] = jnp.zeros_like(pad_ref)
    pad_ref[:, 1:H + 1, 1:W + 1, :] = x

    acc = jnp.zeros((bb, H, W, Cc), jnp.float32)
    for ky in range(3):
        for kx in range(3):
            acc = acc + (pad_ref[:, ky:ky + H, kx:kx + W, :]
                         * prm_ref[_ROW_DW0 + ky * 3 + kx])

    fpw = prm_ref[_ROW_PW_W] * gate                           # (bb, C) folded pointwise w
    bias = jnp.sum(prm_ref[_ROW_BIAS:_ROW_BIAS + 1, :],       # folded dw/pw biases, (1, 1)
                   axis=1, keepdims=True)
    logit = jnp.sum(acc * fpw[:, None, None, :], axis=-1) + bias   # (bb, H, W)
    mask = 1.0 / (1.0 + jnp.exp(-logit))                      # sigmoid
    # TODO(synk): pl.reciprocal(..., approx=True) would move this divide to the
    # EUP slot; kept as plain jnp so the kernel also runs in interpret mode.

    # ---- outputs: attention mask + global-avg-pool of (x * mask).
    # The masked feature map itself never leaves VMEM — the classifier tail
    # only needs its pooled (bb, C) summary.
    mask_ref[...] = mask
    xm = x * mask[..., None]
    pool_ref[...] = (jnp.sum(jnp.sum(xm, axis=1), axis=1) * inv_hw)[:, None, :]


def _pick_block_batch(B, H, W):
    """Batch several images per grid step to amortize per-step overhead, while
    keeping >=2 grid steps (both v7x TensorCores) and a modest VMEM footprint
    (safe for v7x's smaller scoped VMEM, incl. double buffering)."""
    per_img = (H + 2) * (W + 2) * C * 4 * 6      # x block + pad scratch + temps, 2x buffers
    budget = 8 * 1024 * 1024
    bb = 1
    for cand in range(1, B + 1):
        if B % cand:
            continue
        if cand * per_img > budget:
            continue
        if B // cand >= 2 or B == 1:
            bb = cand
    return bb


def attention_block(x_nchw, params, *, block_batch=None):
    """NCHW features -> (mask (B,H,W), pooled masked features (B,C))."""
    B, Cin, H, W = x_nchw.shape
    assert Cin == C
    x = jnp.transpose(x_nchw, (0, 2, 3, 1)).astype(jnp.float32)   # NHWC: C on lanes

    bb = _pick_block_batch(B, H, W) if block_batch is None else block_batch
    assert B % bb == 0

    # Pack the small parameter tensors into one (12, C) block (one DMA instead
    # of six tiny padded ones) and pre-fold the depthwise/pointwise biases.
    bias_const = (jnp.sum(params["pw_w"][0] * params["dw_b"][0])
                  + params["pw_b"][0, 0])
    bias_row = jnp.zeros((1, C), jnp.float32).at[0, 0].set(bias_const)
    prm = jnp.concatenate(
        [params["fc_b"], params["dw_w"], params["pw_w"], bias_row], axis=0)   # (12, C)

    kernel = functools.partial(_attention_kernel, H=H, W=W, Cc=C, bb=bb)
    mask, pooled3 = pl.pallas_call(
        kernel,
        out_shape=(jax.ShapeDtypeStruct((B, H, W), jnp.float32),
                   jax.ShapeDtypeStruct((B, 1, C), jnp.float32)),
        grid=(B // bb,),
        in_specs=[
            pl.BlockSpec((bb, H, W, C), lambda b: (b, 0, 0, 0)),   # block_head features
            pl.BlockSpec((C, C), lambda b: (0, 0)),                # SE fc weight [in, out]
            pl.BlockSpec((_N_ROWS, C), lambda b: (0, 0)),          # packed small params
        ],
        out_specs=[
            pl.BlockSpec((bb, H, W), lambda b: (b, 0, 0)),         # mask (no 1-lane dim)
            pl.BlockSpec((bb, 1, C), lambda b: (b, 0, 0)),         # pooled masked features
        ],
        scratch_shapes=[pltpu.VMEM((bb, H + 2, W + 2, C), jnp.float32)],
        compiler_params=pltpu.CompilerParams(dimension_semantics=("parallel",)),
    )(x, params["fc_w"], prm)
    return mask, pooled3[:, 0, :]


# -----------------------------------------------------------------------------
# Full forward (mirrors Efficient_Attention.forward, returns (logits, mask))
# -----------------------------------------------------------------------------
def efficient_attention_forward(x_nchw, params, dropout_key):
    mask, pooled = attention_block(x_nchw, params)
    # Tail on the tiny (B, 56) pooled tensor in plain JAX: a second pallas_call
    # (and writing the full masked map to HBM just to re-read and pool it)
    # costs far more than it saves.  F.dropout's functional default
    # (training=True) is reproduced deterministically from `dropout_key`.
    # TODO(synk): block_end + trailer (pretrained MBConv stages + conv_head
    # 448->1792) need the timm checkpoint and are not replicated; the
    # classifier runs directly on the 56-channel pooled masked features.
    keep = jax.random.bernoulli(dropout_key, 1.0 - DROP_RATE, pooled.shape)
    feat = pooled * keep.astype(pooled.dtype) * (1.0 / (1.0 - DROP_RATE))
    logits = feat @ params["clf_w"].T + params["clf_b"]               # (B, 1)
    mask_nchw = mask[:, None, :, :]                                   # (B, 1, H, W), free
    return logits, mask_nchw


def init_params(key):
    ks = jax.random.split(key, 8)
    p = {}
    p["fc_w"] = jax.random.normal(ks[0], (C, C), jnp.float32) * 0.05   # SE 1x1 conv, [in,out]
    p["fc_b"] = jax.random.normal(ks[1], (1, C), jnp.float32) * 0.05
    p["dw_w"] = jax.random.normal(ks[2], (9, C), jnp.float32) * 0.10   # depthwise 3x3, [tap,ch]
    p["dw_b"] = jax.random.normal(ks[3], (1, C), jnp.float32) * 0.05
    p["pw_w"] = jax.random.normal(ks[4], (1, C), jnp.float32) * 0.10   # pointwise C->1
    p["pw_b"] = jax.random.normal(ks[5], (1, 1), jnp.float32) * 0.05
    p["clf_w"] = jax.random.normal(ks[6], (1, C), jnp.float32) * 0.05  # classifier Linear
    p["clf_b"] = jnp.zeros((1, 1), jnp.float32)
    return p


if __name__ == "__main__":
    key = jax.random.PRNGKey(0)
    pkey, xkey, dkey = jax.random.split(key, 3)
    params = init_params(pkey)

    B, H, W = 2, 16, 16
    # NCHW feature map at the attention-block level (56 channels)
    x = jax.random.normal(xkey, (B, C, H, W), jnp.float32)

    logits, mask = efficient_attention_forward(x, params, dkey)
    jax.block_until_ready((logits, mask))
    assert logits.shape == (B, 1)
    assert mask.shape == (B, 1, H, W)
    print("KERNEL_OK")
</pallas_src>

<mosaic_0001>
module attributes {stable_mosaic.version = 11 : i64} {
  func.func @_attention_kernel(%arg0: i32, %arg1: memref<1x16x16x56xf32, #tpu.memory_space<vmem>>, %arg2: memref<56x56xf32, #tpu.memory_space<vmem>>, %arg3: memref<12x56xf32, #tpu.memory_space<vmem>>, %arg4: memref<1x16x16xf32, #tpu.memory_space<vmem>>, %arg5: memref<1x1x56xf32, #tpu.memory_space<vmem>>, %arg6: memref<1x18x18x56xf32, #tpu.memory_space<vmem>>) attributes {dimension_semantics = [#tpu.dimension_semantics<parallel>], iteration_bounds = array<i64: 2>, scalar_prefetch = 0 : i64, scratch_operands = 1 : i64, tpu.core_type = #tpu.core_type<tc>, window_params = [{transform_indices = @transform_0, window_bounds = array<i64: 1, 16, 16, 56>}, {pipeline_mode = #tpu.pipeline_mode<synchronous>, transform_indices = @transform_1, window_bounds = array<i64: 56, 56>}, {pipeline_mode = #tpu.pipeline_mode<synchronous>, transform_indices = @transform_2, window_bounds = array<i64: 12, 56>}, {transform_indices = @transform_3, window_bounds = array<i64: 1, 16, 16>}, {transform_indices = @transform_4, window_bounds = array<i64: 1, 1, 56>}]} {
    %c0 = arith.constant 0 : index
    %c0_0 = arith.constant 0 : index
    %c0_1 = arith.constant 0 : index
    %c0_2 = arith.constant 0 : index
    %0 = vector.load %arg1[%c0, %c0_0, %c0_1, %c0_2] : memref<1x16x16x56xf32, #tpu.memory_space<vmem>>, vector<1x16x16x56xf32>
    %cst = arith.constant dense<0.000000e+00> : vector<1x16x56xf32>
    %1 = vector.multi_reduction <add>, %0, %cst [1] : vector<1x16x16x56xf32> to vector<1x16x56xf32>
    %cst_3 = arith.constant dense<0.000000e+00> : vector<1x56xf32>
    %2 = vector.multi_reduction <add>, %1, %cst_3 [1] : vector<1x16x56xf32> to vector<1x56xf32>
    %cst_4 = arith.constant 3.906250e-03 : f32
    %3 = vector.broadcast %cst_4 : f32 to vector<1x56xf32>
    %4 = arith.mulf %2, %3 : vector<1x56xf32>
    %c0_5 = arith.constant 0 : index
    %c0_6 = arith.constant 0 : index
    %5 = vector.load %arg2[%c0_5, %c0_6] : memref<56x56xf32, #tpu.memory_space<vmem>>, vector<56x56xf32>
    %cst_7 = arith.constant dense<0.000000e+00> : vector<1x56xf32>
    %6 = tpu.matmul %4, %5, %cst_7 {dimension_numbers = #tpu.dot_dimension_numbers<[1], [0], [0], [1], [0, 0, 1, 1], [], []>} : vector<1x56xf32>, vector<56x56xf32>, vector<1x56xf32> -> vector<1x56xf32>
    %c0_8 = arith.constant 0 : index
    %c0_9 = arith.constant 0 : index
    %7 = vector.load %arg3[%c0_8, %c0_9] : memref<12x56xf32, #tpu.memory_space<vmem>>, vector<1x56xf32>
    %8 = vector.shape_cast %7 : vector<1x56xf32> to vector<56xf32>
    %9 = vector.shape_cast %8 : vector<56xf32> to vector<1x56xf32>
    %10 = arith.addf %6, %9 : vector<1x56xf32>
    %cst_10 = arith.constant 3.000000e+00 : f32
    %11 = vector.broadcast %cst_10 : f32 to vector<1x56xf32>
    %12 = arith.addf %10, %11 : vector<1x56xf32>
    %cst_11 = arith.constant 0.000000e+00 : f32
    %cst_12 = arith.constant 6.000000e+00 : f32
    %13 = vector.broadcast %cst_11 : f32 to vector<1x56xf32>
    %14 = arith.maximumf %13, %12 : vector<1x56xf32>
    %15 = vector.broadcast %cst_12 : f32 to vector<1x56xf32>
    %16 = arith.minimumf %15, %14 : vector<1x56xf32>
    %cst_13 = arith.constant 0.166666672 : f32
    %17 = vector.broadcast %cst_13 : f32 to vector<1x56xf32>
    %18 = arith.mulf %16, %17 : vector<1x56xf32>
    %cst_14 = arith.constant 0.000000e+00 : f32
    %19 = vector.broadcast %cst_14 : f32 to vector<1x18x18x56xf32>
    %c0_15 = arith.constant 0 : index
    %c0_16 = arith.constant 0 : index
    %c0_17 = arith.constant 0 : index
    %c0_18 = arith.constant 0 : index
    %20 = vector.load %arg6[%c0_15, %c0_16, %c0_17, %c0_18] : memref<1x18x18x56xf32, #tpu.memory_space<vmem>>, vector<1x18x18x56xf32>
    tpu.vector_store %arg6[%c0_15, %c0_16, %c0_17, %c0_18], %19 {strides = array<i32>} : memref<1x18x18x56xf32, #tpu.memory_space<vmem>>, vector<1x18x18x56xf32>,
    %c0_19 = arith.constant 0 : index
    %c1 = arith.constant 1 : index
    %c1_20 = arith.constant 1 : index
    %c0_21 = arith.constant 0 : index
    %21 = vector.load %arg6[%c0_19, %c1, %c1_20, %c0_21] : memref<1x18x18x56xf32, #tpu.memory_space<vmem>>, vector<1x16x16x56xf32>
    tpu.vector_store %arg6[%c0_19, %c1, %c1_20, %c0_21], %0 {strides = array<i32>} : memref<1x18x18x56xf32, #tpu.memory_space<vmem>>, vector<1x16x16x56xf32>,
    %cst_22 = arith.constant 0.000000e+00 : f32
    %22 = vector.broadcast %cst_22 : f32 to vector<1x16x16x56xf32>
    %c0_23 = arith.constant 0 : index
    %c0_24 = arith.constant 0 : index
    %c0_25 = arith.constant 0 : index
    %c0_26 = arith.constant 0 : index
    %23 = vector.load %arg6[%c0_23, %c0_24, %c0_25, %c0_26] : memref<1x18x18x56xf32, #tpu.memory_space<vmem>>, vector<1x16x16x56xf32>
    %c1_27 = arith.constant 1 : index
    %c0_28 = arith.constant 0 : index
    %24 = vector.load %arg3[%c1_27, %c0_28] : memref<12x56xf32, #tpu.memory_space<vmem>>, vector<1x56xf32>
    %25 = vector.shape_cast %24 : vector<1x56xf32> to vector<56xf32>
    %26 = vector.shape_cast %25 : vector<56xf32> to vector<1x1x1x56xf32>
    %27 = vector.broadcast %26 : vector<1x1x1x56xf32> to vector<1x16x16x56xf32>
    %28 = arith.mulf %23, %27 : vector<1x16x16x56xf32>
    %29 = arith.addf %22, %28 : vector<1x16x16x56xf32>
    %c0_29 = arith.constant 0 : index
    %c0_30 = arith.constant 0 : index
    %c1_31 = arith.constant 1 : index
    %c0_32 = arith.constant 0 : index
    %30 = vector.load %arg6[%c0_29, %c0_30, %c1_31, %c0_32] : memref<1x18x18x56xf32, #tpu.memory_space<vmem>>, vector<1x16x16x56xf32>
    %c2 = arith.constant 2 : index
    %c0_33 = arith.constant 0 : index
    %31 = vector.load %arg3[%c2, %c0_33] : memref<12x56xf32, #tpu.memory_space<vmem>>, vector<1x56xf32>
    %32 = vector.shape_cast %31 : vector<1x56xf32> to vector<56xf32>
    %33 = vector.shape_cast %32 : vector<56xf32> to vector<1x1x1x56xf32>
    %34 = vector.broadcast %33 : vector<1x1x1x56xf32> to vector<1x16x16x56xf32>
    %35 = arith.mulf %30, %34 : vector<1x16x16x56xf32>
    %36 = arith.addf %29, %35 : vector<1x16x16x56xf32>
    %c0_34 = arith.constant 0 : index
    %c0_35 = arith.constant 0 : index
    %c2_36 = arith.constant 2 : index
    %c0_37 = arith.constant 0 : index
    %37 = vector.load %arg6[%c0_34, %c0_35, %c2_36, %c0_37] : memref<1x18x18x56xf32, #tpu.memory_space<vmem>>, vector<1x16x16x56xf32>
    %c3 = arith.constant 3 : index
    %c0_38 = arith.constant 0 : index
    %38 = vector.load %arg3[%c3, %c0_38] : memref<12x56xf32, #tpu.memory_space<vmem>>, vector<1x56xf32>
    %39 = vector.shape_cast %38 : vector<1x56xf32> to vector<56xf32>
    %40 = vector.shape_cast %39 : vector<56xf32> to vector<1x1x1x56xf32>
    %41 = vector.broadcast %40 : vector<1x1x1x56xf32> to vector<1x16x16x56xf32>
    %42 = arith.mulf %37, %41 : vector<1x16x16x56xf32>
    %43 = arith.addf %36, %42 : vector<1x16x16x56xf32>
    %c0_39 = arith.constant 0 : index
    %c1_40 = arith.constant 1 : index
    %c0_41 = arith.constant 0 : index
    %c0_42 = arith.constant 0 : index
    %44 = vector.load %arg6[%c0_39, %c1_40, %c0_41, %c0_42] : memref<1x18x18x56xf32, #tpu.memory_space<vmem>>, vector<1x16x16x56xf32>
    %c4 = arith.constant 4 : index
    %c0_43 = arith.constant 0 : index
    %45 = vector.load %arg3[%c4, %c0_43] : memref<12x56xf32, #tpu.memory_space<vmem>>, vector<1x56xf32>
    %46 = vector.shape_cast %45 : vector<1x56xf32> to vector<56xf32>
    %47 = vector.shape_cast %46 : vector<56xf32> to vector<1x1x1x56xf32>
    %48 = vector.broadcast %47 : vector<1x1x1x56xf32> to vector<1x16x16x56xf32>
    %49 = arith.mulf %44, %48 : vector<1x16x16x56xf32>
    %50 = arith.addf %43, %49 : vector<1x16x16x56xf32>
    %c0_44 = arith.constant 0 : index
    %c1_45 = arith.constant 1 : index
    %c1_46 = arith.constant 1 : index
    %c0_47 = arith.constant 0 : index
    %51 = vector.load %arg6[%c0_44, %c1_45, %c1_46, %c0_47] : memref<1x18x18x56xf32, #tpu.memory_space<vmem>>, vector<1x16x16x56xf32>
    %c5 = arith.constant 5 : index
    %c0_48 = arith.constant 0 : index
    %52 = vector.load %arg3[%c5, %c0_48] : memref<12x56xf32, #tpu.memory_space<vmem>>, vector<1x56xf32>
    %53 = vector.shape_cast %52 : vector<1x56xf32> to vector<56xf32>
    %54 = vector.shape_cast %53 : vector<56xf32> to vector<1x1x1x56xf32>
    %55 = vector.broadcast %54 : vector<1x1x1x56xf32> to vector<1x16x16x56xf32>
    %56 = arith.mulf %51, %55 : vector<1x16x16x56xf32>
    %57 = arith.addf %50, %56 : vector<1x16x16x56xf32>
    %c0_49 = arith.constant 0 : index
    %c1_50 = arith.constant 1 : index
    %c2_51 = arith.constant 2 : index
    %c0_52 = arith.constant 0 : index
    %58 = vector.load %arg6[%c0_49, %c1_50, %c2_51, %c0_52] : memref<1x18x18x56xf32, #tpu.memory_space<vmem>>, vector<1x16x16x56xf32>
    %c6 = arith.constant 6 : index
    %c0_53 = arith.constant 0 : index
    %59 = vector.load %arg3[%c6, %c0_53] : memref<12x56xf32, #tpu.memory_space<vmem>>, vector<1x56xf32>
    %60 = vector.shape_cast %59 : vector<1x56xf32> to vector<56xf32>
    %61 = vector.shape_cast %60 : vector<56xf32> to vector<1x1x1x56xf32>
    %62 = vector.broadcast %61 : vector<1x1x1x56xf32> to vector<1x16x16x56xf32>
    %63 = arith.mulf %58, %62 : vector<1x16x16x56xf32>
    %64 = arith.addf %57, %63 : vector<1x16x16x56xf32>
    %c0_54 = arith.constant 0 : index
    %c2_55 = arith.constant 2 : index
    %c0_56 = arith.constant 0 : index
    %c0_57 = arith.constant 0 : index
    %65 = vector.load %arg6[%c0_54, %c2_55, %c0_56, %c0_57] : memref<1x18x18x56xf32, #tpu.memory_space<vmem>>, vector<1x16x16x56xf32>
    %c7 = arith.constant 7 : index
    %c0_58 = arith.constant 0 : index
    %66 = vector.load %arg3[%c7, %c0_58] : memref<12x56xf32, #tpu.memory_space<vmem>>, vector<1x56xf32>
    %67 = vector.shape_cast %66 : vector<1x56xf32> to vector<56xf32>
    %68 = vector.shape_cast %67 : vector<56xf32> to vector<1x1x1x56xf32>
    %69 = vector.broadcast %68 : vector<1x1x1x56xf32> to vector<1x16x16x56xf32>
    %70 = arith.mulf %65, %69 : vector<1x16x16x56xf32>
    %71 = arith.addf %64, %70 : vector<1x16x16x56xf32>
    %c0_59 = arith.constant 0 : index
    %c2_60 = arith.constant 2 : index
    %c1_61 = arith.constant 1 : index
    %c0_62 = arith.constant 0 : index
    %72 = vector.load %arg6[%c0_59, %c2_60, %c1_61, %c0_62] : memref<1x18x18x56xf32, #tpu.memory_space<vmem>>, vector<1x16x16x56xf32>
    %c8 = arith.constant 8 : index
    %c0_63 = arith.constant 0 : index
    %73 = vector.load %arg3[%c8, %c0_63] : memref<12x56xf32, #tpu.memory_space<vmem>>, vector<1x56xf32>
    %74 = vector.shape_cast %73 : vector<1x56xf32> to vector<56xf32>
    %75 = vector.shape_cast %74 : vector<56xf32> to vector<1x1x1x56xf32>
    %76 = vector.broadcast %75 : vector<1x1x1x56xf32> to vector<1x16x16x56xf32>
    %77 = arith.mulf %72, %76 : vector<1x16x16x56xf32>
    %78 = arith.addf %71, %77 : vector<1x16x16x56xf32>
    %c0_64 = arith.constant 0 : index
    %c2_65 = arith.constant 2 : index
    %c2_66 = arith.constant 2 : index
    %c0_67 = arith.constant 0 : index
    %79 = vector.load %arg6[%c0_64, %c2_65, %c2_66, %c0_67] : memref<1x18x18x56xf32, #tpu.memory_space<vmem>>, vector<1x16x16x56xf32>
    %c9 = arith.constant 9 : index
    %c0_68 = arith.constant 0 : index
    %80 = vector.load %arg3[%c9, %c0_68] : memref<12x56xf32, #tpu.memory_space<vmem>>, vector<1x56xf32>
    %81 = vector.shape_cast %80 : vector<1x56xf32> to vector<56xf32>
    %82 = vector.shape_cast %81 : vector<56xf32> to vector<1x1x1x56xf32>
    %83 = vector.broadcast %82 : vector<1x1x1x56xf32> to vector<1x16x16x56xf32>
    %84 = arith.mulf %79, %83 : vector<1x16x16x56xf32>
    %85 = arith.addf %78, %84 : vector<1x16x16x56xf32>
    %c10 = arith.constant 10 : index
    %c0_69 = arith.constant 0 : index
    %86 = vector.load %arg3[%c10, %c0_69] : memref<12x56xf32, #tpu.memory_space<vmem>>, vector<1x56xf32>
    %87 = vector.shape_cast %86 : vector<1x56xf32> to vector<56xf32>
    %88 = vector.shape_cast %87 : vector<56xf32> to vector<1x56xf32>
    %89 = arith.mulf %88, %18 : vector<1x56xf32>
    %c11 = arith.constant 11 : index
    %c0_70 = arith.constant 0 : index
    %90 = vector.load %arg3[%c11, %c0_70] : memref<12x56xf32, #tpu.memory_space<vmem>>, vector<1x56xf32>
    %cst_71 = arith.constant dense<0.000000e+00> : vector<1xf32>
    %91 = vector.multi_reduction <add>, %90, %cst_71 [1] : vector<1x56xf32> to vector<1xf32>
    %92 = vector.shape_cast %91 : vector<1xf32> to vector<1x1xf32>
    %93 = vector.shape_cast %89 : vector<1x56xf32> to vector<1x1x1x56xf32>
    %94 = vector.broadcast %93 : vector<1x1x1x56xf32> to vector<1x16x16x56xf32>
    %95 = arith.mulf %85, %94 : vector<1x16x16x56xf32>
    %cst_72 = arith.constant dense<0.000000e+00> : vector<1x16x16xf32>
    %96 = vector.multi_reduction <add>, %95, %cst_72 [3] : vector<1x16x16x56xf32> to vector<1x16x16xf32>
    %97 = vector.shape_cast %92 : vector<1x1xf32> to vector<1x1x1xf32>
    %98 = vector.broadcast %97 : vector<1x1x1xf32> to vector<1x16x16xf32>
    %99 = arith.addf %96, %98 : vector<1x16x16xf32>
    %cst_73 = arith.constant 0.000000e+00 : f32
    %100 = vector.broadcast %cst_73 : f32 to vector<1x16x16xf32>
    %101 = arith.subf %100, %99 : vector<1x16x16xf32>
    %102 = math.exp %101 : vector<1x16x16xf32>
    %cst_74 = arith.constant 1.000000e+00 : f32
    %103 = vector.broadcast %cst_74 : f32 to vector<1x16x16xf32>
    %104 = arith.addf %103, %102 : vector<1x16x16xf32>
    %cst_75 = arith.constant 1.000000e+00 : f32
    %105 = vector.broadcast %cst_75 : f32 to vector<1x16x16xf32>
    %106 = arith.divf %105, %104 : vector<1x16x16xf32>
    %c0_76 = arith.constant 0 : index
    %c0_77 = arith.constant 0 : index
    %c0_78 = arith.constant 0 : index
    %107 = vector.load %arg4[%c0_76, %c0_77, %c0_78] : memref<1x16x16xf32, #tpu.memory_space<vmem>>, vector<1x16x16xf32>
    tpu.vector_store %arg4[%c0_76, %c0_77, %c0_78], %106 {strides = array<i32>} : memref<1x16x16xf32, #tpu.memory_space<vmem>>, vector<1x16x16xf32>,
    %108 = vector.shape_cast %106 : vector<1x16x16xf32> to vector<1x16x16x1xf32>
    %109 = vector.broadcast %108 : vector<1x16x16x1xf32> to vector<1x16x16x56xf32>
    %110 = arith.mulf %0, %109 : vector<1x16x16x56xf32>
    %cst_79 = arith.constant dense<0.000000e+00> : vector<1x16x56xf32>
    %111 = vector.multi_reduction <add>, %110, %cst_79 [1] : vector<1x16x16x56xf32> to vector<1x16x56xf32>
    %cst_80 = arith.constant dense<0.000000e+00> : vector<1x56xf32>
    %112 = vector.multi_reduction <add>, %111, %cst_80 [1] : vector<1x16x56xf32> to vector<1x56xf32>
    %cst_81 = arith.constant 3.906250e-03 : f32
    %113 = vector.broadcast %cst_81 : f32 to vector<1x56xf32>
    %114 = arith.mulf %112, %113 : vector<1x56xf32>
    %115 = vector.shape_cast %114 : vector<1x56xf32> to vector<1x1x56xf32>
    %c0_82 = arith.constant 0 : index
    %c0_83 = arith.constant 0 : index
    %c0_84 = arith.constant 0 : index
    %116 = vector.load %arg5[%c0_82, %c0_83, %c0_84] : memref<1x1x56xf32, #tpu.memory_space<vmem>>, vector<1x1x56xf32>
    tpu.vector_store %arg5[%c0_82, %c0_83, %c0_84], %115 {strides = array<i32>} : memref<1x1x56xf32, #tpu.memory_space<vmem>>, vector<1x1x56xf32>,
    return
  }
  func.func @transform_0(%arg0: i32) -> (i32, i32, i32, i32) {
    %c0_i32 = arith.constant 0 : i32
    %c0_i32_0 = arith.constant 0 : i32
    %c0_i32_1 = arith.constant 0 : i32
    %c0_i32_2 = arith.constant 0 : i32
    return %arg0, %c0_i32, %c0_i32_0, %c0_i32_1 : i32, i32, i32, i32
  }
  func.func @transform_1(%arg0: i32) -> (i32, i32) {
    %c0_i32 = arith.constant 0 : i32
    %c0_i32_0 = arith.constant 0 : i32
    %c0_i32_1 = arith.constant 0 : i32
    return %c0_i32, %c0_i32_0 : i32, i32
  }
  func.func @transform_2(%arg0: i32) -> (i32, i32) {
    %c0_i32 = arith.constant 0 : i32
    %c0_i32_0 = arith.constant 0 : i32
    %c0_i32_1 = arith.constant 0 : i32
    return %c0_i32, %c0_i32_0 : i32, i32
  }
  func.func @transform_3(%arg0: i32) -> (i32, i32, i32) {
    %c0_i32 = arith.constant 0 : i32
    %c0_i32_0 = arith.constant 0 : i32
    %c0_i32_1 = arith.constant 0 : i32
    return %arg0, %c0_i32, %c0_i32_0 : i32, i32, i32
  }
  func.func @transform_4(%arg0: i32) -> (i32, i32, i32) {
    %c0_i32 = arith.constant 0 : i32
    %c0_i32_0 = arith.constant 0 : i32
    %c0_i32_1 = arith.constant 0 : i32
    return %arg0, %c0_i32, %c0_i32_0 : i32, i32, i32
  }
}

</mosaic_0001>

<llo_original>
// kernel: tpu_custom_call.1
$region0: #{tpu_custom_call.1}
  #allocation0 [shape = 'u32[]', space=smem, size = 0x4, offset = 0x4, fixed_abs, tag = 'smem constant byte address 0x4 - core index']
  #allocation1 [shape = 'u32[144,128]{1,0:T(1,128)}', space=vmem, size = 0x12000, scoped, tag = 'internal scratch']
  #allocation2 [shape = 'f32[1,18,18,56]{3,2,1,0:T(8,128)}', space=vmem, size = 0x36000, scoped, tag = 'scratch operand']
  %s0 = inlined_call_operand.hbm [shape: f32[2,16,16,56], index: 0, kind: input, shape index: {}]
  %s1 = inlined_call_operand.hbm [shape: f32[56,56], index: 1, kind: input, shape index: {}]
  %s2 = inlined_call_operand.hbm [shape: f32[12,56], index: 2, kind: input, shape index: {}]
  %s3 = inlined_call_operand.hbm [shape: f32[2,16,16], index: 3, kind: output, shape index: {0}]
  %s4 = inlined_call_operand.hbm [shape: f32[2,1,56], index: 4, kind: output, shape index: {1}]
  %5 = xla_tuple %s3, %s4
  %s6 = sld [smem:[#allocation0]]
  $region65: #{tpu_custom_call.1} parent=0
    _
  %s8 = ssub.s32 1, %s6
  %s9 = scalar_select 0, %s8, %s6
  $region1: #{tpu_custom_call.1} parent=0
    #allocation3 [shape = 'u8[262144]{0}', space=vmem, size = 0x40000, scoped, tag = 'input window, operand 0']
    #allocation4 [shape = 's32[2]{0}', space=sflag, size = 0x8, scoped, tag = 'scoped memory for tpu_custom_call.1']
    #allocation5 [shape = 's32[2]{0}', space=sflag, size = 0x8, scoped, tag = 'scoped memory for tpu_custom_call.1']
    #allocation6 [shape = 'u8[28672]{0}', space=vmem, size = 0x7000, scoped, tag = 'input window, operand 1, single buffered']
    #allocation7 [shape = 's32[1]{0}', space=sflag, size = 0x4, scoped, tag = 'scoped memory for tpu_custom_call.1']
    #allocation8 [shape = 'u8[8192]{0}', space=vmem, size = 0x2000, scoped, tag = 'input window, operand 2, single buffered']
    #allocation9 [shape = 'u8[16384]{0}', space=vmem, size = 0x4000, scoped, tag = 'output window, operand 0']
    #allocation10 [shape = 'u8[1024]{0}', space=vmem, size = 0x400, scoped, tag = 'output window, operand 1']
    #allocation11 [shape = 's32[2]{0}', space=sflag, size = 0x8, scoped, tag = 'scoped memory for tpu_custom_call.1']
    %10 = vsyncpa [#allocation4], 0
    %s11 = scalar_lea.sflag [#allocation4], 1
    %12 = vsyncpa %s11, 0
    %13 = vsyncpa [#allocation7], 0
    %14 = vsyncpa [#allocation5], 0
    %s15 = scalar_lea.sflag [#allocation5], 1
    %16 = vsyncpa %s15, 0
    %17 = vsyncpa [#allocation11], 0
    %s18 = scalar_lea.sflag [#allocation11], 1
    %19 = vsyncpa %s18, 0
    loop: start=0, step=1, limit=4
    $region2: #{tpu_custom_call.1} parent=1 // loop_pre_header
      _
    $region3: #{tpu_custom_call.1} parent=1 // loop_header
      %s21 = sphi 0, %s25
      %p22 = scmp.ge.s32.totalorder %s21, 4
      %s31 = sphi 0, %s33
      %s34 = sphi 0, %s31
      %s35 = sphi 0, %s34
      %s51 = sphi 0, %s35
      %s55 = sphi 0, %s55
      %s57 = sphi 0, %s55
      %s58 = sphi 0, %s57
      %s72 = sphi 0, %s58
      %s76 = sphi 0, %s76
      %s78 = sphi 0, %s76
      %s79 = sphi 0, %s78
      %s93 = sphi 0, %s79
      %s99 = sphi 0, %s101
      %s102 = sphi 0, %s99
      %s103 = sphi 0, %s102
      %s119 = sphi 0, %s103
      %s125 = sphi 0, %s127
      %s128 = sphi 0, %s125
      %s129 = sphi 0, %s128
      %s145 = sphi 0, %s129
    $region4: #{tpu_custom_call.1} parent=1 // loop_header_branch
      %24 = sbr.rel (%p22) target = $region8
    $region5: #{tpu_custom_call.1} parent=1 // loop_body
      %s26 = ssub.s32 %s21, 1
      %s27 = ssub.s32 %s21, 2
      %s28 = sadd.s32 %s21, 1
      %s29 = ssub.s32 %s21, %s28
      %p30 = scmp.eq.s32.totalorder %s29, 0
      %s32 = sadd.s32 %s31, 1
      %s33 = scalar_select %p30, %s31, %s32
      %p36 = pneg %p30
      %p37 = scmp.eq.s32.totalorder %s21, 1
      %p38 = por %p36, %p37
      %p39 = scmp.ne.s32.totalorder %s31, %s34
      %p40 = scmp.eq.s32.totalorder %s21, 0
      %p41 = por %p39, %p40
      %p42 = scmp.ne.s32.totalorder %s31, %s34
      %p43 = scmp.eq.s32.totalorder %s26, 1
      %p44 = por %p42, %p43
      %p45 = scmp.ne.s32.totalorder %s34, %s35
      %p46 = scmp.eq.s32.totalorder %s26, 0
      %p47 = por %p45, %p46
      %p48 = scmp.ne.s32.totalorder %s34, %s35
      %p49 = scmp.eq.s32.totalorder %s27, 1
      %p50 = por %p48, %p49
      %p52 = scmp.ne.s32.totalorder %s35, %s51
      %p53 = scmp.eq.s32.totalorder %s27, 0
      %p54 = por %p52, %p53
      %s56 = sadd.s32 %s55, 1
      %p59 = scmp.eq.s32.totalorder %s21, 1
      %p60 = scmp.ne.s32.totalorder %s55, %s57
      %p61 = scmp.eq.s32.totalorder %s21, 0
      %p62 = por %p60, %p61
      %p63 = scmp.ne.s32.totalorder %s55, %s57
      %p64 = scmp.eq.s32.totalorder %s26, 1
      %p65 = por %p63, %p64
      %p66 = scmp.ne.s32.totalorder %s57, %s58
      %p67 = scmp.eq.s32.totalorder %s26, 0
      %p68 = por %p66, %p67
      %p69 = scmp.ne.s32.totalorder %s57, %s58
      %p70 = scmp.eq.s32.totalorder %s27, 1
      %p71 = por %p69, %p70
      %p73 = scmp.ne.s32.totalorder %s58, %s72
      %p74 = scmp.eq.s32.totalorder %s27, 0
      %p75 = por %p73, %p74
      %s77 = sadd.s32 %s76, 1
      %p80 = scmp.eq.s32.totalorder %s21, 1
      %p81 = scmp.ne.s32.totalorder %s76, %s78
      %p82 = scmp.eq.s32.totalorder %s21, 0
      %p83 = por %p81, %p82
      %p84 = scmp.ne.s32.totalorder %s76, %s78
      %p85 = scmp.eq.s32.totalorder %s26, 1
      %p86 = por %p84, %p85
      %p87 = scmp.ne.s32.totalorder %s78, %s79
      %p88 = scmp.eq.s32.totalorder %s26, 0
      %p89 = por %p87, %p88
      %p90 = scmp.ne.s32.totalorder %s78, %s79
      %p91 = scmp.eq.s32.totalorder %s27, 1
      %p92 = por %p90, %p91
      %p94 = scmp.ne.s32.totalorder %s79, %s93
      %p95 = scmp.eq.s32.totalorder %s27, 0
      %p96 = por %p94, %p95
      %s97 = ssub.s32 %s21, %s28
      %p98 = scmp.eq.s32.totalorder %s97, 0
      %s100 = sadd.s32 %s99, 1
      %s101 = scalar_select %p98, %s99, %s100
      %p104 = pneg %p98
      %p105 = scmp.eq.s32.totalorder %s21, 1
      %p106 = por %p104, %p105
      %p107 = scmp.ne.s32.totalorder %s99, %s102
      %p108 = scmp.eq.s32.totalorder %s21, 0
      %p109 = por %p107, %p108
      %p110 = scmp.ne.s32.totalorder %s99, %s102
      %p111 = scmp.eq.s32.totalorder %s26, 1
      %p112 = por %p110, %p111
      %p113 = scmp.ne.s32.totalorder %s102, %s103
      %p114 = scmp.eq.s32.totalorder %s26, 0
      %p115 = por %p113, %p114
      %p116 = scmp.ne.s32.totalorder %s102, %s103
      %p117 = scmp.eq.s32.totalorder %s27, 1
      %p118 = por %p116, %p117
      %p120 = scmp.ne.s32.totalorder %s103, %s119
      %p121 = scmp.eq.s32.totalorder %s27, 0
      %p122 = por %p120, %p121
      %s123 = ssub.s32 %s21, %s28
      %p124 = scmp.eq.s32.totalorder %s123, 0
      %s126 = sadd.s32 %s125, 1
      %s127 = scalar_select %p124, %s125, %s126
      %p130 = pneg %p124
      %p131 = scmp.eq.s32.totalorder %s21, 1
      %p132 = por %p130, %p131
      %p133 = scmp.ne.s32.totalorder %s125, %s128
      %p134 = scmp.eq.s32.totalorder %s21, 0
      %p135 = por %p133, %p134
      %p136 = scmp.ne.s32.totalorder %s125, %s128
      %p137 = scmp.eq.s32.totalorder %s26, 1
      %p138 = por %p136, %p137
      %p139 = scmp.ne.s32.totalorder %s128, %s129
      %p140 = scmp.eq.s32.totalorder %s26, 0
      %p141 = por %p139, %p140
      %p142 = scmp.ne.s32.totalorder %s128, %s129
      %p143 = scmp.eq.s32.totalorder %s27, 1
      %p144 = por %p142, %p143
      %p146 = scmp.ne.s32.totalorder %s129, %s145
      %p147 = scmp.eq.s32.totalorder %s27, 0
      %p148 = por %p146, %p147
      %p149 = scmp.le.s32.totalorder 1, %s21
      %p150 = scmp.lt.s32.totalorder %s21, 3
      %p151 = pnand %p149, %p150
      %p152 = pneg %p151
      // Predicated region
      $region9: #{tpu_custom_call.1} parent=5 // pred_check
        _
      $region10: #{tpu_custom_call.1} parent=5 // pred_check_branch
        %154 = sbr.rel (%p151) target = $region12
      $region11: #{tpu_custom_call.1} parent=5 // pred_region
        %s155 = ssub.s32 %s21, 1
        // Predicated region
        $region13: #{tpu_custom_call.1} parent=11 // pred_check
          %p156 = pneg %p68
        $region14: #{tpu_custom_call.1} parent=11 // pred_check_branch
          %158 = sbr.rel (%p156) target = $region16
        $region15: #{tpu_custom_call.1} parent=11 // pred_region
          %s160 = ssub.s32 896, 896
          %161 = vsyncadd [#allocation7], %s160
          %s162 = sshll.u32 [#allocation6], 4
          %s163 = int_to_ptr.vmem [resolvable:$true] %s162
          %168 = dma.hbm_to_vmem [thread:$0]  %s1, 896, %s163, [#allocation7], 128, 128, 8
        $region16: #{tpu_custom_call.1} parent=11 // pred_fallthru
          _
        // Predicated region
        $region17: #{tpu_custom_call.1} parent=11 // pred_check
          %p169 = pneg %p89
        $region18: #{tpu_custom_call.1} parent=11 // pred_check_branch
          %171 = sbr.rel (%p169) target = $region20
        $region19: #{tpu_custom_call.1} parent=11 // pred_region
          %s173 = ssub.s32 256, 256
          %174 = vsyncadd [#allocation7], %s173
          %s175 = sshll.u32 [#allocation8], 4
          %s176 = int_to_ptr.vmem [resolvable:$true] %s175
          %181 = dma.hbm_to_vmem [thread:$0]  %s2, 256, %s176, [#allocation7], 128, 128, 8
        $region20: #{tpu_custom_call.1} parent=11 // pred_fallthru
          _
      $region12: #{tpu_custom_call.1} parent=5 // pred_fallthru
        _
      %p182 = scmp.lt.s32.totalorder %s21, 2
      // Predicated region
      $region21: #{tpu_custom_call.1} parent=5 // pred_check
        %p183 = pneg %p182
      $region22: #{tpu_custom_call.1} parent=5 // pred_check_branch
        %185 = sbr.rel (%p183) target = $region24
      $region23: #{tpu_custom_call.1} parent=5 // pred_region
        // Predicated region
        $region25: #{tpu_custom_call.1} parent=23 // pred_check
          %p186 = pneg %p41
        $region26: #{tpu_custom_call.1} parent=23 // pred_check_branch
          %188 = sbr.rel (%p186) target = $region28
        $region27: #{tpu_custom_call.1} parent=23 // pred_region
          %s189 = sand.u32 %s31, 1
          %s190 = scalar_lea.sflag [#allocation4], %s189
          %s191 = sand.u32 %s31, 1
          %s192 = smul.addr %s191, 256
          %s193 = scalar_lea.vmem [#allocation3], %s192
          %s195 = ssub.s32 4096, 4096
          %196 = vsyncadd %s190, %s195
          %s197 = smul.addr %s21, 32
          %s198 = smul.addr %s197, 128
          %s199 = scalar_lea.hbm %s0, %s198
          %s200 = sshll.u32 %s193, 4
          %s201 = int_to_ptr.vmem [resolvable:$true] %s200
          %206 = dma.hbm_to_vmem [thread:$0]  %s199, 4096, %s201, %s190, 128, 128, 8
        $region28: #{tpu_custom_call.1} parent=23 // pred_fallthru
          _
      $region24: #{tpu_custom_call.1} parent=5 // pred_fallthru
        _
      %p207 = scmp.le.s32.totalorder 1, %s21
      %p208 = scmp.lt.s32.totalorder %s21, 3
      %p209 = pnand %p207, %p208
      %p210 = pneg %p209
      // Predicated region
      $region29: #{tpu_custom_call.1} parent=5 // pred_check
        _
      $region30: #{tpu_custom_call.1} parent=5 // pred_check_branch
        %212 = sbr.rel (%p209) target = $region32
      $region31: #{tpu_custom_call.1} parent=5 // pred_region
        %s213 = ssub.s32 %s21, 1
        %s214 = sand.u32 %s34, 1
        %s215 = scalar_lea.sflag [#allocation4], %s214
        %s216 = sand.u32 %s34, 1
        %s217 = smul.addr %s216, 256
        %s218 = scalar_lea.vmem [#allocation3], %s217
        // Predicated region
        $region33: #{tpu_custom_call.1} parent=31 // pred_check
          %p219 = pneg %p47
        $region34: #{tpu_custom_call.1} parent=31 // pred_check_branch
          %221 = sbr.rel (%p219) target = $region36
        $region35: #{tpu_custom_call.1} parent=31 // pred_region
          %222 = dma.done %s215, 4096
        $region36: #{tpu_custom_call.1} parent=31 // pred_fallthru
          _
        // Predicated region
        $region37: #{tpu_custom_call.1} parent=31 // pred_check
          %p223 = pneg %p68
        $region38: #{tpu_custom_call.1} parent=31 // pred_check_branch
          %225 = sbr.rel (%p223) target = $region40
        $region39: #{tpu_custom_call.1} parent=31 // pred_region
          %226 = dma.done [#allocation7], 896
        $region40: #{tpu_custom_call.1} parent=31 // pred_fallthru
          _
        // Predicated region
        $region41: #{tpu_custom_call.1} parent=31 // pred_check
          %p227 = pneg %p89
        $region42: #{tpu_custom_call.1} parent=31 // pred_check_branch
          %229 = sbr.rel (%p227) target = $region44
        $region43: #{tpu_custom_call.1} parent=31 // pred_region
          %230 = dma.done [#allocation7], 256
        $region44: #{tpu_custom_call.1} parent=31 // pred_fallthru
          _
        %s231 = sand.u32 %s34, 1
        %s232 = scalar_lea.sflag [#allocation4], %s231
        %s233 = sand.u32 %s34, 1
        %s234 = smul.addr %s233, 256
        %s235 = scalar_lea.vmem [#allocation3], %s234
        %p236 = pneg %p47
        %p237 = pneg %p44
        %p238 = pneg %p68
        %p239 = pneg %p65
        %p240 = pneg %p89
        %p241 = pneg %p86
        %p242 = pneg %p115
        %p243 = pneg %p112
        %s244 = sand.u32 %s102, 1
        %s245 = scalar_lea.sflag [#allocation5], %s244
        %s246 = sand.u32 %s102, 1
        %s247 = smul.addr %s246, 16
        %s248 = scalar_lea.vmem [#allocation9], %s247
        %p249 = pneg %p141
        %p250 = pneg %p138
        %s251 = sand.u32 %s128, 1
        %s252 = scalar_lea.sflag [#allocation11], %s251
        %s253 = sand.u32 %s128, 1
        %s254 = scalar_lea.vmem [#allocation10], %s253
        %v255 = vld [vmem:[%s218] sm:$0xff]
        %v256 = vld [vmem:[%s218 + $0x8] sm:$0xff]
        %v257 = vld [vmem:[%s218 + $0x10] sm:$0xff]
        %v258 = vld [vmem:[%s218 + $0x18] sm:$0xff]
        %v259 = vld [vmem:[%s218 + $0x20] sm:$0xff]
        %v260 = vld [vmem:[%s218 + $0x28] sm:$0xff]
        %v261 = vld [vmem:[%s218 + $0x30] sm:$0xff]
        %v262 = vld [vmem:[%s218 + $0x38] sm:$0xff]
        %v263 = vld [vmem:[%s218 + $0x40] sm:$0xff]
        %v264 = vld [vmem:[%s218 + $0x48] sm:$0xff]
        %v265 = vld [vmem:[%s218 + $0x50] sm:$0xff]
        %v266 = vld [vmem:[%s218 + $0x58] sm:$0xff]
        %v267 = vld [vmem:[%s218 + $0x60] sm:$0xff]
        %v268 = vld [vmem:[%s218 + $0x68] sm:$0xff]
        %v269 = vld [vmem:[%s218 + $0x70] sm:$0xff]
        %v270 = vld [vmem:[%s218 + $0x78] sm:$0xff]
        %v271 = vld [vmem:[%s218 + $0x80] sm:$0xff]
        %v272 = vld [vmem:[%s218 + $0x88] sm:$0xff]
        %v273 = vld [vmem:[%s218 + $0x90] sm:$0xff]
        %v274 = vld [vmem:[%s218 + $0x98] sm:$0xff]
        %v275 = vld [vmem:[%s218 + $0xa0] sm:$0xff]
        %v276 = vld [vmem:[%s218 + $0xa8] sm:$0xff]
        %v277 = vld [vmem:[%s218 + $0xb0] sm:$0xff]
        %v278 = vld [vmem:[%s218 + $0xb8] sm:$0xff]
        %v279 = vld [vmem:[%s218 + $0xc0] sm:$0xff]
        %v280 = vld [vmem:[%s218 + $0xc8] sm:$0xff]
        %v281 = vld [vmem:[%s218 + $0xd0] sm:$0xff]
        %v282 = vld [vmem:[%s218 + $0xd8] sm:$0xff]
        %v283 = vld [vmem:[%s218 + $0xe0] sm:$0xff]
        %v284 = vld [vmem:[%s218 + $0xe8] sm:$0xff]
        %v285 = vld [vmem:[%s218 + $0xf0] sm:$0xff]
        %v286 = vld [vmem:[%s218 + $0xf8] sm:$0xff]
        %vm287 = vcmask 457728
        %v288 = vsel %vm287, %v255, 0.0
        %v289 = vsel %vm287, %v257, 0.0
        %v290 = vadd.f32 %v288, %v289
        %v291 = vsel %vm287, %v259, 0.0
        %v292 = vadd.f32 %v290, %v291
        %v293 = vsel %vm287, %v261, 0.0
        %v294 = vadd.f32 %v292, %v293
        %v295 = vsel %vm287, %v263, 0.0
        %v296 = vadd.f32 %v294, %v295
        %v297 = vsel %vm287, %v265, 0.0
        %v298 = vadd.f32 %v296, %v297
        %v299 = vsel %vm287, %v267, 0.0
        %v300 = vadd.f32 %v298, %v299
        %v301 = vsel %vm287, %v269, 0.0
        %v302 = vadd.f32 %v300, %v301
        %v303 = vsel %vm287, %v271, 0.0
        %v304 = vadd.f32 %v302, %v303
        %v305 = vsel %vm287, %v273, 0.0
        %v306 = vadd.f32 %v304, %v305
        %v307 = vsel %vm287, %v275, 0.0
        %v308 = vadd.f32 %v306, %v307
        %v309 = vsel %vm287, %v277, 0.0
        %v310 = vadd.f32 %v308, %v309
        %v311 = vsel %vm287, %v279, 0.0
        %v312 = vadd.f32 %v310, %v311
        %v313 = vsel %vm287, %v281, 0.0
        %v314 = vadd.f32 %v312, %v313
        %v315 = vsel %vm287, %v283, 0.0
        %v316 = vadd.f32 %v314, %v315
        %v317 = vsel %vm287, %v285, 0.0
        %v318 = vadd.f32 %v316, %v317
        %v319 = vsel %vm287, %v256, 0.0
        %v320 = vsel %vm287, %v258, 0.0
        %v321 = vadd.f32 %v319, %v320
        %v322 = vsel %vm287, %v260, 0.0
        %v323 = vadd.f32 %v321, %v322
        %v324 = vsel %vm287, %v262, 0.0
        %v325 = vadd.f32 %v323, %v324
        %v326 = vsel %vm287, %v264, 0.0
        %v327 = vadd.f32 %v325, %v326
        %v328 = vsel %vm287, %v266, 0.0
        %v329 = vadd.f32 %v327, %v328
        %v330 = vsel %vm287, %v268, 0.0
        %v331 = vadd.f32 %v329, %v330
        %v332 = vsel %vm287, %v270, 0.0
        %v333 = vadd.f32 %v331, %v332
        %v334 = vsel %vm287, %v272, 0.0
        %v335 = vadd.f32 %v333, %v334
        %v336 = vsel %vm287, %v274, 0.0
        %v337 = vadd.f32 %v335, %v336
        %v338 = vsel %vm287, %v276, 0.0
        %v339 = vadd.f32 %v337, %v338
        %v340 = vsel %vm287, %v278, 0.0
        %v341 = vadd.f32 %v339, %v340
        %v342 = vsel %vm287, %v280, 0.0
        %v343 = vadd.f32 %v341, %v342
        %v344 = vsel %vm287, %v282, 0.0
        %v345 = vadd.f32 %v343, %v344
        %v346 = vsel %vm287, %v284, 0.0
        %v347 = vadd.f32 %v345, %v346
        %v348 = vsel %vm287, %v286, 0.0
        %v349 = vadd.f32 %v347, %v348
        %v350 = vsel %vm287, %v318, 0.0
        %v351 = vsel %vm287, %v349, 0.0
        %v352 = vadd.f32 %v350, %v351
        %v353 = vrot.slane %v352, 4
        %v354 = vadd.f32 %v352, %v353
        %v355 = vrot.slane %v354, 2
        %v356 = vadd.f32 %v354, %v355
        %v357 = vrot.slane %v356, 1
        %v358 = vadd.f32 %v356, %v357
        %v359 = vmul.f32 %v358, 0.00390625
        %v360 = vld [vmem:[#allocation6] sm:$0xff]
        %v361 = vld [vmem:[#allocation6 + $0x8] sm:$0xff]
        %v362 = vld [vmem:[#allocation6 + $0x10] sm:$0xff]
        %v363 = vld [vmem:[#allocation6 + $0x18] sm:$0xff]
        %v364 = vld [vmem:[#allocation6 + $0x20] sm:$0xff]
        %v365 = vld [vmem:[#allocation6 + $0x28] sm:$0xff]
        %v366 = vld [vmem:[#allocation6 + $0x30] sm:$0xff]
        %v367 = vld [vmem:[#allocation8] sm:$0x1]
        %v369 = vsel %vm287, %v359, 0
        %371 = vmatprep.subr.mxu0 0.0
        %372 = vmatpush1.msra.mxu0 %v360
        %373 = vmatprep.subr.mxu0 0.0
        %374 = vmatpush1.msra.mxu0 %v361
        %375 = vmatprep.subr.mxu0 0.0
        %376 = vmatpush1.msra.mxu0 %v362
        %377 = vmatprep.subr.mxu0 0.0
        %378 = vmatpush1.msra.mxu0 %v363
        %379 = vmatprep.subr.mxu0 0.0
        %380 = vmatpush1.msra.mxu0 %v364
        %381 = vmatprep.subr.mxu0 0.0
        %382 = vmatpush1.msra.mxu0 %v365
        %383 = vmatprep.subr.mxu0 0.0
        %384 = vmatpush1.msra.mxu0 %v366
        %385 = vmatprep.subr.mxu0 0.0
        %386 = vmatpush1.msra.mxu0 0.0
        %387 = vmatprep.subr.mxu0 0.0
        %388 = vmatpush1.msra.mxu0 0.0
        %389 = vmatprep.subr.mxu0 0.0
        %390 = vmatpush1.msra.mxu0 0.0
        %391 = vmatprep.subr.mxu0 0.0
        %392 = vmatpush1.msra.mxu0 0.0
        %393 = vmatprep.subr.mxu0 0.0
        %394 = vmatpush1.msra.mxu0 0.0
        %395 = vmatprep.subr.mxu0 0.0
        %396 = vmatpush1.msra.mxu0 0.0
        %397 = vmatprep.subr.mxu0 0.0
        %398 = vmatpush1.msra.mxu0 0.0
        %399 = vmatprep.subr.mxu0 0.0
        %400 = vmatpush1.msra.mxu0 0.0
        %401 = vmatprep.subr.mxu0 0.0
        %402 = vmatpush1.msra.mxu0 0.0
        %403 = vmatprep.subr.mxu0 0.0
        %404 = vmatpush1.msra.mxu0 0.0
        %405 = vmatprep.subr.mxu0 0.0
        %406 = vmatpush1.msra.mxu0 0.0
        %407 = vmatprep.subr.mxu0 0.0
        %408 = vmatpush1.msra.mxu0 0.0
        %409 = vmatprep.subr.mxu0 0.0
        %410 = vmatpush1.msra.mxu0 0.0
        %411 = vmatprep.subr.mxu0 0.0
        %412 = vmatpush1.msra.mxu0 0.0
        %413 = vmatprep.subr.mxu0 0.0
        %414 = vmatpush1.msra.mxu0 0.0
        %415 = vmatprep.subr.mxu0 0.0
        %416 = vmatpush1.msra.mxu0 0.0
        %417 = vmatprep.subr.mxu0 0.0
        %418 = vmatpush1.msra.mxu0 0.0
        %419 = vmatprep.subr.mxu0 0.0
        %420 = vmatpush1.msra.mxu0 0.0
        %421 = vmatprep.subr.mxu0 0.0
        %422 = vmatpush1.msra.mxu0 0.0
        %423 = vmatprep.subr.mxu0 0.0
        %424 = vmatpush1.msra.mxu0 0.0
        %425 = vmatprep.subr.mxu0 0.0
        %426 = vmatpush1.msra.mxu0 0.0
        %427 = vmatprep.subr.mxu0 0.0
        %428 = vmatpush1.msra.mxu0 0.0
        %429 = vmatprep.subr.mxu0 0.0
        %430 = vmatpush1.msra.mxu0 0.0
        %431 = vmatprep.subr.mxu0 0.0
        %432 = vmatpush1.msra.mxu0 0.0
        %433 = vmatprep.subr.mxu0 0.0
        %434 = vmatpush1.msra.mxu0 0.0
        %435 = vmatprep.mubr.f32.mxu0 0.0
        %436 = vmatmul.mubr.f32.gmra.mrb[0].mxu0 %v369
        %v437 = vpop.f32.mrb[0].mxu0
        %v438 = vadd.f32 %v367, %v437
        %v439 = vpop.f32.mrb[0].mxu0
        %440 = vdwg.mxu0
        %v441 = vadd.f32 %v438, 3.0
        %v442 = vmax.f32 %v441, 0.0
        %v443 = vmin.f32 %v442, 6.0
        %v444 = vmul.f32 %v443, 0.16666667
        %445 = vst.msk [vmem:[#allocation2] sm:$0xff] %vm287, 0.0
        %446 = vst.msk [vmem:[#allocation2 + $0x8] sm:$0xff] %vm287, 0.0
        %vm447 = vcmask 451584
        %448 = vst.msk [vmem:[#allocation2 + $0x10] sm:$0x3] %vm447, 0.0
        %449 = vst.msk [vmem:[#allocation2 + $0x18] sm:$0xff] %vm287, 0.0
        %450 = vst.msk [vmem:[#allocation2 + $0x20] sm:$0xff] %vm287, 0.0
        %451 = vst.msk [vmem:[#allocation2 + $0x28] sm:$0x3] %vm447, 0.0
        %452 = vst.msk [vmem:[#allocation2 + $0x30] sm:$0xff] %vm287, 0.0
        %453 = vst.msk [vmem:[#allocation2 + $0x38] sm:$0xff] %vm287, 0.0
        %454 = vst.msk [vmem:[#allocation2 + $0x40] sm:$0x3] %vm447, 0.0
        %455 = vst.msk [vmem:[#allocation2 + $0x48] sm:$0xff] %vm287, 0.0
        %456 = vst.msk [vmem:[#allocation2 + $0x50] sm:$0xff] %vm287, 0.0
        %457 = vst.msk [vmem:[#allocation2 + $0x58] sm:$0x3] %vm447, 0.0
        %458 = vst.msk [vmem:[#allocation2 + $0x60] sm:$0xff] %vm287, 0.0
        %459 = vst.msk [vmem:[#allocation2 + $0x68] sm:$0xff] %vm287, 0.0
        %460 = vst.msk [vmem:[#allocation2 + $0x70] sm:$0x3] %vm447, 0.0
        %461 = vst.msk [vmem:[#allocation2 + $0x78] sm:$0xff] %vm287, 0.0
        %462 = vst.msk [vmem:[#allocation2 + $0x80] sm:$0xff] %vm287, 0.0
        %463 = vst.msk [vmem:[#allocation2 + $0x88] sm:$0x3] %vm447, 0.0
        %464 = vst.msk [vmem:[#allocation2 + $0x90] sm:$0xff] %vm287, 0.0
        %465 = vst.msk [vmem:[#allocation2 + $0x98] sm:$0xff] %vm287, 0.0
        %466 = vst.msk [vmem:[#allocation2 + $0xa0] sm:$0x3] %vm447, 0.0
        %467 = vst.msk [vmem:[#allocation2 + $0xa8] sm:$0xff] %vm287, 0.0
        %468 = vst.msk [vmem:[#allocation2 + $0xb0] sm:$0xff] %vm287, 0.0
        %469 = vst.msk [vmem:[#allocation2 + $0xb8] sm:$0x3] %vm447, 0.0
        %470 = vst.msk [vmem:[#allocation2 + $0xc0] sm:$0xff] %vm287, 0.0
        %471 = vst.msk [vmem:[#allocation2 + $0xc8] sm:$0xff] %vm287, 0.0
        %472 = vst.msk [vmem:[#allocation2 + $0xd0] sm:$0x3] %vm447, 0.0
        %473 = vst.msk [vmem:[#allocation2 + $0xd8] sm:$0xff] %vm287, 0.0
        %474 = vst.msk [vmem:[#allocation2 + $0xe0] sm:$0xff] %vm287, 0.0
        %475 = vst.msk [vmem:[#allocation2 + $0xe8] sm:$0x3] %vm447, 0.0
        %476 = vst.msk [vmem:[#allocation2 + $0xf0] sm:$0xff] %vm287, 0.0
        %477 = vst.msk [vmem:[#allocation2 + $0xf8] sm:$0xff] %vm287, 0.0
        %478 = vst.msk [vmem:[#allocation2 + $0x100] sm:$0x3] %vm447, 0.0
        %479 = vst.msk [vmem:[#allocation2 + $0x108] sm:$0xff] %vm287, 0.0
        %480 = vst.msk [vmem:[#allocation2 + $0x110] sm:$0xff] %vm287, 0.0
        %481 = vst.msk [vmem:[#allocation2 + $0x118] sm:$0x3] %vm447, 0.0
        %482 = vst.msk [vmem:[#allocation2 + $0x120] sm:$0xff] %vm287, 0.0
        %483 = vst.msk [vmem:[#allocation2 + $0x128] sm:$0xff] %vm287, 0.0
        %484 = vst.msk [vmem:[#allocation2 + $0x130] sm:$0x3] %vm447, 0.0
        %485 = vst.msk [vmem:[#allocation2 + $0x138] sm:$0xff] %vm287, 0.0
        %486 = vst.msk [vmem:[#allocation2 + $0x140] sm:$0xff] %vm287, 0.0
        %487 = vst.msk [vmem:[#allocation2 + $0x148] sm:$0x3] %vm447, 0.0
        %488 = vst.msk [vmem:[#allocation2 + $0x150] sm:$0xff] %vm287, 0.0
        %489 = vst.msk [vmem:[#allocation2 + $0x158] sm:$0xff] %vm287, 0.0
        %490 = vst.msk [vmem:[#allocation2 + $0x160] sm:$0x3] %vm447, 0.0
        %491 = vst.msk [vmem:[#allocation2 + $0x168] sm:$0xff] %vm287, 0.0
        %492 = vst.msk [vmem:[#allocation2 + $0x170] sm:$0xff] %vm287, 0.0
        %493 = vst.msk [vmem:[#allocation2 + $0x178] sm:$0x3] %vm447, 0.0
        %494 = vst.msk [vmem:[#allocation2 + $0x180] sm:$0xff] %vm287, 0.0
        %495 = vst.msk [vmem:[#allocation2 + $0x188] sm:$0xff] %vm287, 0.0
        %496 = vst.msk [vmem:[#allocation2 + $0x190] sm:$0x3] %vm447, 0.0
        %497 = vst.msk [vmem:[#allocation2 + $0x198] sm:$0xff] %vm287, 0.0
        %498 = vst.msk [vmem:[#allocation2 + $0x1a0] sm:$0xff] %vm287, 0.0
        %499 = vst.msk [vmem:[#allocation2 + $0x1a8] sm:$0x3] %vm447, 0.0
        %s500 = scalar_lea.vmem [#allocation2], 24
        %501 = vst.msk [vmem:[%s500 + $0x1] sm:$0xff] %vm287, %v255
        %502 = vst.msk [vmem:[%s500 + $0x9] sm:$0xff] %vm287, %v256
        %503 = vst.msk [vmem:[%s500 + $0x19] sm:$0xff] %vm287, %v257
        %504 = vst.msk [vmem:[%s500 + $0x21] sm:$0xff] %vm287, %v258
        %505 = vst.msk [vmem:[%s500 + $0x31] sm:$0xff] %vm287, %v259
        %506 = vst.msk [vmem:[%s500 + $0x39] sm:$0xff] %vm287, %v260
        %507 = vst.msk [vmem:[%s500 + $0x49] sm:$0xff] %vm287, %v261
        %508 = vst.msk [vmem:[%s500 + $0x51] sm:$0xff] %vm287, %v262
        %509 = vst.msk [vmem:[%s500 + $0x61] sm:$0xff] %vm287, %v263
        %510 = vst.msk [vmem:[%s500 + $0x69] sm:$0xff] %vm287, %v264
        %511 = vst.msk [vmem:[%s500 + $0x79] sm:$0xff] %vm287, %v265
        %512 = vst.msk [vmem:[%s500 + $0x81] sm:$0xff] %vm287, %v266
        %513 = vst.msk [vmem:[%s500 + $0x91] sm:$0xff] %vm287, %v267
        %514 = vst.msk [vmem:[%s500 + $0x99] sm:$0xff] %vm287, %v268
        %515 = vst.msk [vmem:[%s500 + $0xa9] sm:$0xff] %vm287, %v269
        %516 = vst.msk [vmem:[%s500 + $0xb1] sm:$0xff] %vm287, %v270
        %517 = vst.msk [vmem:[%s500 + $0xc1] sm:$0xff] %vm287, %v271
        %518 = vst.msk [vmem:[%s500 + $0xc9] sm:$0xff] %vm287, %v272
        %519 = vst.msk [vmem:[%s500 + $0xd9] sm:$0xff] %vm287, %v273
        %520 = vst.msk [vmem:[%s500 + $0xe1] sm:$0xff] %vm287, %v274
        %521 = vst.msk [vmem:[%s500 + $0xf1] sm:$0xff] %vm287, %v275
        %522 = vst.msk [vmem:[%s500 + $0xf9] sm:$0xff] %vm287, %v276
        %523 = vst.msk [vmem:[%s500 + $0x109] sm:$0xff] %vm287, %v277
        %524 = vst.msk [vmem:[%s500 + $0x111] sm:$0xff] %vm287, %v278
        %525 = vst.msk [vmem:[%s500 + $0x121] sm:$0xff] %vm287, %v279
        %526 = vst.msk [vmem:[%s500 + $0x129] sm:$0xff] %vm287, %v280
        %527 = vst.msk [vmem:[%s500 + $0x139] sm:$0xff] %vm287, %v281
        %528 = vst.msk [vmem:[%s500 + $0x141] sm:$0xff] %vm287, %v282
        %529 = vst.msk [vmem:[%s500 + $0x151] sm:$0xff] %vm287, %v283
        %530 = vst.msk [vmem:[%s500 + $0x159] sm:$0xff] %vm287, %v284
        %531 = vst.msk [vmem:[%s500 + $0x169] sm:$0xff] %vm287, %v285
        %532 = vst.msk [vmem:[%s500 + $0x171] sm:$0xff] %vm287, %v286
        %v533 = vld [vmem:[#allocation2] sm:$0xff]
        %v534 = vld [vmem:[#allocation2 + $0x8] sm:$0xff]
        %v535 = vld [vmem:[#allocation2 + $0x18] sm:$0xff]
        %v536 = vld [vmem:[#allocation2 + $0x20] sm:$0xff]
        %v537 = vld [vmem:[#allocation2 + $0x30] sm:$0xff]
        %v538 = vld [vmem:[#allocation2 + $0x38] sm:$0xff]
        %v539 = vld [vmem:[#allocation2 + $0x48] sm:$0xff]
        %v540 = vld [vmem:[#allocation2 + $0x50] sm:$0xff]
        %v541 = vld [vmem:[#allocation2 + $0x60] sm:$0xff]
        %v542 = vld [vmem:[#allocation2 + $0x68] sm:$0xff]
        %v543 = vld [vmem:[#allocation2 + $0x78] sm:$0xff]
        %v544 = vld [vmem:[#allocation2 + $0x80] sm:$0xff]
        %v545 = vld [vmem:[#allocation2 + $0x90] sm:$0xff]
        %v546 = vld [vmem:[#allocation2 + $0x98] sm:$0xff]
        %v547 = vld [vmem:[#allocation2 + $0xa8] sm:$0xff]
        %v548 = vld [vmem:[#allocation2 + $0xb0] sm:$0xff]
        %v549 = vld [vmem:[#allocation2 + $0xc0] sm:$0xff]
        %v550 = vld [vmem:[#allocation2 + $0xc8] sm:$0xff]
        %v551 = vld [vmem:[#allocation2 + $0xd8] sm:$0xff]
        %v552 = vld [vmem:[#allocation2 + $0xe0] sm:$0xff]
        %v553 = vld [vmem:[#allocation2 + $0xf0] sm:$0xff]
        %v554 = vld [vmem:[#allocation2 + $0xf8] sm:$0xff]
        %v555 = vld [vmem:[#allocation2 + $0x108] sm:$0xff]
        %v556 = vld [vmem:[#allocation2 + $0x110] sm:$0xff]
        %v557 = vld [vmem:[#allocation2 + $0x120] sm:$0xff]
        %v558 = vld [vmem:[#allocation2 + $0x128] sm:$0xff]
        %v559 = vld [vmem:[#allocation2 + $0x138] sm:$0xff]
        %v560 = vld [vmem:[#allocation2 + $0x140] sm:$0xff]
        %v561 = vld [vmem:[#allocation2 + $0x150] sm:$0xff]
        %v562 = vld [vmem:[#allocation2 + $0x158] sm:$0xff]
        %v563 = vld [vmem:[#allocation2 + $0x168] sm:$0xff]
        %v564 = vld [vmem:[#allocation2 + $0x170] sm:$0xff]
        %v565 = vld [vmem:[#allocation8 + $0x1] sm:$0x1]
        %v566 = vlaneseq
        %v567 = vshrl.u32 %v566, 7
        %v568 = vsub.s32 0, %v567
        %v569 = vrot.slane %v565, %v568
        %v570 = vmul.f32 %v533, %v569
        %v571 = vmul.f32 %v534, %v569
        %v572 = vmul.f32 %v535, %v569
        %v573 = vmul.f32 %v536, %v569
        %v574 = vmul.f32 %v537, %v569
        %v575 = vmul.f32 %v538, %v569
        %v576 = vmul.f32 %v539, %v569
        %v577 = vmul.f32 %v540, %v569
        %v578 = vmul.f32 %v541, %v569
        %v579 = vmul.f32 %v542, %v569
        %v580 = vmul.f32 %v543, %v569
        %v581 = vmul.f32 %v544, %v569
        %v582 = vmul.f32 %v545, %v569
        %v583 = vmul.f32 %v546, %v569
        %v584 = vmul.f32 %v547, %v569
        %v585 = vmul.f32 %v548, %v569
        %v586 = vmul.f32 %v549, %v569
        %v587 = vmul.f32 %v550, %v569
        %v588 = vmul.f32 %v551, %v569
        %v589 = vmul.f32 %v552, %v569
        %v590 = vmul.f32 %v553, %v569
        %v591 = vmul.f32 %v554, %v569
        %v592 = vmul.f32 %v555, %v569
        %v593 = vmul.f32 %v556, %v569
        %v594 = vmul.f32 %v557, %v569
        %v595 = vmul.f32 %v558, %v569
        %v596 = vmul.f32 %v559, %v569
        %v597 = vmul.f32 %v560, %v569
        %v598 = vmul.f32 %v561, %v569
        %v599 = vmul.f32 %v562, %v569
        %v600 = vmul.f32 %v563, %v569
        %v601 = vmul.f32 %v564, %v569
        %v602 = vadd.f32 %v570, 0.0
        %v603 = vadd.f32 %v571, 0.0
        %v604 = vadd.f32 %v572, 0.0
        %v605 = vadd.f32 %v573, 0.0
        %v606 = vadd.f32 %v574, 0.0
        %v607 = vadd.f32 %v575, 0.0
        %v608 = vadd.f32 %v576, 0.0
        %v609 = vadd.f32 %v577, 0.0
        %v610 = vadd.f32 %v578, 0.0
        %v611 = vadd.f32 %v579, 0.0
        %v612 = vadd.f32 %v580, 0.0
        %v613 = vadd.f32 %v581, 0.0
        %v614 = vadd.f32 %v582, 0.0
        %v615 = vadd.f32 %v583, 0.0
        %v616 = vadd.f32 %v584, 0.0
        %v617 = vadd.f32 %v585, 0.0
        %v618 = vadd.f32 %v586, 0.0
        %v619 = vadd.f32 %v587, 0.0
        %v620 = vadd.f32 %v588, 0.0
        %v621 = vadd.f32 %v589, 0.0
        %v622 = vadd.f32 %v590, 0.0
        %v623 = vadd.f32 %v591, 0.0
        %v624 = vadd.f32 %v592, 0.0
        %v625 = vadd.f32 %v593, 0.0
        %v626 = vadd.f32 %v594, 0.0
        %v627 = vadd.f32 %v595, 0.0
        %v628 = vadd.f32 %v596, 0.0
        %v629 = vadd.f32 %v597, 0.0
        %v630 = vadd.f32 %v598, 0.0
        %v631 = vadd.f32 %v599, 0.0
        %v632 = vadd.f32 %v600, 0.0
        %v633 = vadd.f32 %v601, 0.0
        %v634 = vld [vmem:[#allocation2 + $0x1] sm:$0xff]
        %v635 = vld [vmem:[#allocation2 + $0x9] sm:$0xff]
        %v636 = vld [vmem:[#allocation2 + $0x19] sm:$0xff]
        %v637 = vld [vmem:[#allocation2 + $0x21] sm:$0xff]
        %v638 = vld [vmem:[#allocation2 + $0x31] sm:$0xff]
        %v639 = vld [vmem:[#allocation2 + $0x39] sm:$0xff]
        %v640 = vld [vmem:[#allocation2 + $0x49] sm:$0xff]
        %v641 = vld [vmem:[#allocation2 + $0x51] sm:$0xff]
        %v642 = vld [vmem:[#allocation2 + $0x61] sm:$0xff]
        %v643 = vld [vmem:[#allocation2 + $0x69] sm:$0xff]
        %v644 = vld [vmem:[#allocation2 + $0x79] sm:$0xff]
        %v645 = vld [vmem:[#allocation2 + $0x81] sm:$0xff]
        %v646 = vld [vmem:[#allocation2 + $0x91] sm:$0xff]
        %v647 = vld [vmem:[#allocation2 + $0x99] sm:$0xff]
        %v648 = vld [vmem:[#allocation2 + $0xa9] sm:$0xff]
        %v649 = vld [vmem:[#allocation2 + $0xb1] sm:$0xff]
        %v650 = vld [vmem:[#allocation2 + $0xc1] sm:$0xff]
        %v651 = vld [vmem:[#allocation2 + $0xc9] sm:$0xff]
        %v652 = vld [vmem:[#allocation2 + $0xd9] sm:$0xff]
        %v653 = vld [vmem:[#allocation2 + $0xe1] sm:$0xff]
        %v654 = vld [vmem:[#allocation2 + $0xf1] sm:$0xff]
        %v655 = vld [vmem:[#allocation2 + $0xf9] sm:$0xff]
        %v656 = vld [vmem:[#allocation2 + $0x109] sm:$0xff]
        %v657 = vld [vmem:[#allocation2 + $0x111] sm:$0xff]
        %v658 = vld [vmem:[#allocation2 + $0x121] sm:$0xff]
        %v659 = vld [vmem:[#allocation2 + $0x129] sm:$0xff]
        %v660 = vld [vmem:[#allocation2 + $0x139] sm:$0xff]
        %v661 = vld [vmem:[#allocation2 + $0x141] sm:$0xff]
        %v662 = vld [vmem:[#allocation2 + $0x151] sm:$0xff]
        %v663 = vld [vmem:[#allocation2 + $0x159] sm:$0xff]
        %v664 = vld [vmem:[#allocation2 + $0x169] sm:$0xff]
        %v665 = vld [vmem:[#allocation2 + $0x171] sm:$0xff]
        %v666 = vld [vmem:[#allocation8 + $0x2] sm:$0x1]
        %v667 = vlaneseq
        %v668 = vshrl.u32 %v667, 7
        %v669 = vsub.s32 0, %v668
        %v670 = vrot.slane %v666, %v669
        %v671 = vmul.f32 %v634, %v670
        %v672 = vmul.f32 %v635, %v670
        %v673 = vmul.f32 %v636, %v670
        %v674 = vmul.f32 %v637, %v670
        %v675 = vmul.f32 %v638, %v670
        %v676 = vmul.f32 %v639, %v670
        %v677 = vmul.f32 %v640, %v670
        %v678 = vmul.f32 %v641, %v670
        %v679 = vmul.f32 %v642, %v670
        %v680 = vmul.f32 %v643, %v670
        %v681 = vmul.f32 %v644, %v670
        %v682 = vmul.f32 %v645, %v670
        %v683 = vmul.f32 %v646, %v670
        %v684 = vmul.f32 %v647, %v670
        %v685 = vmul.f32 %v648, %v670
        %v686 = vmul.f32 %v649, %v670
        %v687 = vmul.f32 %v650, %v670
        %v688 = vmul.f32 %v651, %v670
        %v689 = vmul.f32 %v652, %v670
        %v690 = vmul.f32 %v653, %v670
        %v691 = vmul.f32 %v654, %v670
        %v692 = vmul.f32 %v655, %v670
        %v693 = vmul.f32 %v656, %v670
        %v694 = vmul.f32 %v657, %v670
        %v695 = vmul.f32 %v658, %v670
        %v696 = vmul.f32 %v659, %v670
        %v697 = vmul.f32 %v660, %v670
        %v698 = vmul.f32 %v661, %v670
        %v699 = vmul.f32 %v662, %v670
        %v700 = vmul.f32 %v663, %v670
        %v701 = vmul.f32 %v664, %v670
        %v702 = vmul.f32 %v665, %v670
        %v703 = vadd.f32 %v602, %v671
        %v704 = vadd.f32 %v603, %v672
        %v705 = vadd.f32 %v604, %v673
        %v706 = vadd.f32 %v605, %v674
        %v707 = vadd.f32 %v606, %v675
        %v708 = vadd.f32 %v607, %v676
        %v709 = vadd.f32 %v608, %v677
        %v710 = vadd.f32 %v609, %v678
        %v711 = vadd.f32 %v610, %v679
        %v712 = vadd.f32 %v611, %v680
        %v713 = vadd.f32 %v612, %v681
        %v714 = vadd.f32 %v613, %v682
        %v715 = vadd.f32 %v614, %v683
        %v716 = vadd.f32 %v615, %v684
        %v717 = vadd.f32 %v616, %v685
        %v718 = vadd.f32 %v617, %v686
        %v719 = vadd.f32 %v618, %v687
        %v720 = vadd.f32 %v619, %v688
        %v721 = vadd.f32 %v620, %v689
        %v722 = vadd.f32 %v621, %v690
        %v723 = vadd.f32 %v622, %v691
        %v724 = vadd.f32 %v623, %v692
        %v725 = vadd.f32 %v624, %v693
        %v726 = vadd.f32 %v625, %v694
        %v727 = vadd.f32 %v626, %v695
        %v728 = vadd.f32 %v627, %v696
        %v729 = vadd.f32 %v628, %v697
        %v730 = vadd.f32 %v629, %v698
        %v731 = vadd.f32 %v630, %v699
        %v732 = vadd.f32 %v631, %v700
        %v733 = vadd.f32 %v632, %v701
        %v734 = vadd.f32 %v633, %v702
        %v735 = vld [vmem:[#allocation2 + $0x2] sm:$0xff]
        %v736 = vld [vmem:[#allocation2 + $0xa] sm:$0xff]
        %v737 = vld [vmem:[#allocation2 + $0x1a] sm:$0xff]
        %v738 = vld [vmem:[#allocation2 + $0x22] sm:$0xff]
        %v739 = vld [vmem:[#allocation2 + $0x32] sm:$0xff]
        %v740 = vld [vmem:[#allocation2 + $0x3a] sm:$0xff]
        %v741 = vld [vmem:[#allocation2 + $0x4a] sm:$0xff]
        %v742 = vld [vmem:[#allocation2 + $0x52] sm:$0xff]
        %v743 = vld [vmem:[#allocation2 + $0x62] sm:$0xff]
        %v744 = vld [vmem:[#allocation2 + $0x6a] sm:$0xff]
        %v745 = vld [vmem:[#allocation2 + $0x7a] sm:$0xff]
        %v746 = vld [vmem:[#allocation2 + $0x82] sm:$0xff]
        %v747 = vld [vmem:[#allocation2 + $0x92] sm:$0xff]
        %v748 = vld [vmem:[#allocation2 + $0x9a] sm:$0xff]
        %v749 = vld [vmem:[#allocation2 + $0xaa] sm:$0xff]
        %v750 = vld [vmem:[#allocation2 + $0xb2] sm:$0xff]
        %v751 = vld [vmem:[#allocation2 + $0xc2] sm:$0xff]
        %v752 = vld [vmem:[#allocation2 + $0xca] sm:$0xff]
        %v753 = vld [vmem:[#allocation2 + $0xda] sm:$0xff]
        %v754 = vld [vmem:[#allocation2 + $0xe2] sm:$0xff]
        %v755 = vld [vmem:[#allocation2 + $0xf2] sm:$0xff]
        %v756 = vld [vmem:[#allocation2 + $0xfa] sm:$0xff]
        %v757 = vld [vmem:[#allocation2 + $0x10a] sm:$0xff]
        %v758 = vld [vmem:[#allocation2 + $0x112] sm:$0xff]
        %v759 = vld [vmem:[#allocation2 + $0x122] sm:$0xff]
        %v760 = vld [vmem:[#allocation2 + $0x12a] sm:$0xff]
        %v761 = vld [vmem:[#allocation2 + $0x13a] sm:$0xff]
        %v762 = vld [vmem:[#allocation2 + $0x142] sm:$0xff]
        %v763 = vld [vmem:[#allocation2 + $0x152] sm:$0xff]
        %v764 = vld [vmem:[#allocation2 + $0x15a] sm:$0xff]
        %v765 = vld [vmem:[#allocation2 + $0x16a] sm:$0xff]
        %v766 = vld [vmem:[#allocation2 + $0x172] sm:$0xff]
        %v767 = vld [vmem:[#allocation8 + $0x3] sm:$0x1]
        %v768 = vlaneseq
        %v769 = vshrl.u32 %v768, 7
        %v770 = vsub.s32 0, %v769
        %v771 = vrot.slane %v767, %v770
        %v772 = vmul.f32 %v735, %v771
        %v773 = vmul.f32 %v736, %v771
        %v774 = vmul.f32 %v737, %v771
        %v775 = vmul.f32 %v738, %v771
        %v776 = vmul.f32 %v739, %v771
        %v777 = vmul.f32 %v740, %v771
        %v778 = vmul.f32 %v741, %v771
        %v779 = vmul.f32 %v742, %v771
        %v780 = vmul.f32 %v743, %v771
        %v781 = vmul.f32 %v744, %v771
        %v782 = vmul.f32 %v745, %v771
        %v783 = vmul.f32 %v746, %v771
        %v784 = vmul.f32 %v747, %v771
        %v785 = vmul.f32 %v748, %v771
        %v786 = vmul.f32 %v749, %v771
        %v787 = vmul.f32 %v750, %v771
        %v788 = vmul.f32 %v751, %v771
        %v789 = vmul.f32 %v752, %v771
        %v790 = vmul.f32 %v753, %v771
        %v791 = vmul.f32 %v754, %v771
        %v792 = vmul.f32 %v755, %v771
        %v793 = vmul.f32 %v756, %v771
        %v794 = vmul.f32 %v757, %v771
        %v795 = vmul.f32 %v758, %v771
        %v796 = vmul.f32 %v759, %v771
        %v797 = vmul.f32 %v760, %v771
        %v798 = vmul.f32 %v761, %v771
        %v799 = vmul.f32 %v762, %v771
        %v800 = vmul.f32 %v763, %v771
        %v801 = vmul.f32 %v764, %v771
        %v802 = vmul.f32 %v765, %v771
        %v803 = vmul.f32 %v766, %v771
        %v804 = vadd.f32 %v703, %v772
        %v805 = vadd.f32 %v704, %v773
        %v806 = vadd.f32 %v705, %v774
        %v807 = vadd.f32 %v706, %v775
        %v808 = vadd.f32 %v707, %v776
        %v809 = vadd.f32 %v708, %v777
        %v810 = vadd.f32 %v709, %v778
        %v811 = vadd.f32 %v710, %v779
        %v812 = vadd.f32 %v711, %v780
        %v813 = vadd.f32 %v712, %v781
        %v814 = vadd.f32 %v713, %v782
        %v815 = vadd.f32 %v714, %v783
        %v816 = vadd.f32 %v715, %v784
        %v817 = vadd.f32 %v716, %v785
        %v818 = vadd.f32 %v717, %v786
        %v819 = vadd.f32 %v718, %v787
        %v820 = vadd.f32 %v719, %v788
        %v821 = vadd.f32 %v720, %v789
        %v822 = vadd.f32 %v721, %v790
        %v823 = vadd.f32 %v722, %v791
        %v824 = vadd.f32 %v723, %v792
        %v825 = vadd.f32 %v724, %v793
        %v826 = vadd.f32 %v725, %v794
        %v827 = vadd.f32 %v726, %v795
        %v828 = vadd.f32 %v727, %v796
        %v829 = vadd.f32 %v728, %v797
        %v830 = vadd.f32 %v729, %v798
        %v831 = vadd.f32 %v730, %v799
        %v832 = vadd.f32 %v731, %v800
        %v833 = vadd.f32 %v732, %v801
        %v834 = vadd.f32 %v733, %v802
        %v835 = vadd.f32 %v734, %v803
        %v836 = vld [vmem:[%s500] sm:$0xff]
        %v837 = vld [vmem:[%s500 + $0x8] sm:$0xff]
        %v838 = vld [vmem:[%s500 + $0x18] sm:$0xff]
        %v839 = vld [vmem:[%s500 + $0x20] sm:$0xff]
        %v840 = vld [vmem:[%s500 + $0x30] sm:$0xff]
        %v841 = vld [vmem:[%s500 + $0x38] sm:$0xff]
        %v842 = vld [vmem:[%s500 + $0x48] sm:$0xff]
        %v843 = vld [vmem:[%s500 + $0x50] sm:$0xff]
        %v844 = vld [vmem:[%s500 + $0x60] sm:$0xff]
        %v845 = vld [vmem:[%s500 + $0x68] sm:$0xff]
        %v846 = vld [vmem:[%s500 + $0x78] sm:$0xff]
        %v847 = vld [vmem:[%s500 + $0x80] sm:$0xff]
        %v848 = vld [vmem:[%s500 + $0x90] sm:$0xff]
        %v849 = vld [vmem:[%s500 + $0x98] sm:$0xff]
        %v850 = vld [vmem:[%s500 + $0xa8] sm:$0xff]
        %v851 = vld [vmem:[%s500 + $0xb0] sm:$0xff]
        %v852 = vld [vmem:[%s500 + $0xc0] sm:$0xff]
        %v853 = vld [vmem:[%s500 + $0xc8] sm:$0xff]
        %v854 = vld [vmem:[%s500 + $0xd8] sm:$0xff]
        %v855 = vld [vmem:[%s500 + $0xe0] sm:$0xff]
        %v856 = vld [vmem:[%s500 + $0xf0] sm:$0xff]
        %v857 = vld [vmem:[%s500 + $0xf8] sm:$0xff]
        %v858 = vld [vmem:[%s500 + $0x108] sm:$0xff]
        %v859 = vld [vmem:[%s500 + $0x110] sm:$0xff]
        %v860 = vld [vmem:[%s500 + $0x120] sm:$0xff]
        %v861 = vld [vmem:[%s500 + $0x128] sm:$0xff]
        %v862 = vld [vmem:[%s500 + $0x138] sm:$0xff]
        %v863 = vld [vmem:[%s500 + $0x140] sm:$0xff]
        %v864 = vld [vmem:[%s500 + $0x150] sm:$0xff]
        %v865 = vld [vmem:[%s500 + $0x158] sm:$0xff]
        %v866 = vld [vmem:[%s500 + $0x168] sm:$0xff]
        %v867 = vld [vmem:[%s500 + $0x170] sm:$0xff]
        %v868 = vld [vmem:[#allocation8 + $0x4] sm:$0x1]
        %v869 = vlaneseq
        %v870 = vshrl.u32 %v869, 7
        %v871 = vsub.s32 0, %v870
        %v872 = vrot.slane %v868, %v871
        %v873 = vmul.f32 %v836, %v872
        %v874 = vmul.f32 %v837, %v872
        %v875 = vmul.f32 %v838, %v872
        %v876 = vmul.f32 %v839, %v872
        %v877 = vmul.f32 %v840, %v872
        %v878 = vmul.f32 %v841, %v872
        %v879 = vmul.f32 %v842, %v872
        %v880 = vmul.f32 %v843, %v872
        %v881 = vmul.f32 %v844, %v872
        %v882 = vmul.f32 %v845, %v872
        %v883 = vmul.f32 %v846, %v872
        %v884 = vmul.f32 %v847, %v872
        %v885 = vmul.f32 %v848, %v872
        %v886 = vmul.f32 %v849, %v872
        %v887 = vmul.f32 %v850, %v872
        %v888 = vmul.f32 %v851, %v872
        %v889 = vmul.f32 %v852, %v872
        %v890 = vmul.f32 %v853, %v872
        %v891 = vmul.f32 %v854, %v872
        %v892 = vmul.f32 %v855, %v872
        %v893 = vmul.f32 %v856, %v872
        %v894 = vmul.f32 %v857, %v872
        %v895 = vmul.f32 %v858, %v872
        %v896 = vmul.f32 %v859, %v872
        %v897 = vmul.f32 %v860, %v872
        %v898 = vmul.f32 %v861, %v872
        %v899 = vmul.f32 %v862, %v872
        %v900 = vmul.f32 %v863, %v872
        %v901 = vmul.f32 %v864, %v872
        %v902 = vmul.f32 %v865, %v872
        %v903 = vmul.f32 %v866, %v872
        %v904 = vmul.f32 %v867, %v872
        %v905 = vadd.f32 %v804, %v873
        %v906 = vadd.f32 %v805, %v874
        %v907 = vadd.f32 %v806, %v875
        %v908 = vadd.f32 %v807, %v876
        %v909 = vadd.f32 %v808, %v877
        %v910 = vadd.f32 %v809, %v878
        %v911 = vadd.f32 %v810, %v879
        %v912 = vadd.f32 %v811, %v880
        %v913 = vadd.f32 %v812, %v881
        %v914 = vadd.f32 %v813, %v882
        %v915 = vadd.f32 %v814, %v883
        %v916 = vadd.f32 %v815, %v884
        %v917 = vadd.f32 %v816, %v885
        %v918 = vadd.f32 %v817, %v886
        %v919 = vadd.f32 %v818, %v887
        %v920 = vadd.f32 %v819, %v888
        %v921 = vadd.f32 %v820, %v889
        %v922 = vadd.f32 %v821, %v890
        %v923 = vadd.f32 %v822, %v891
        %v924 = vadd.f32 %v823, %v892
        %v925 = vadd.f32 %v824, %v893
        %v926 = vadd.f32 %v825, %v894
        %v927 = vadd.f32 %v826, %v895
        %v928 = vadd.f32 %v827, %v896
        %v929 = vadd.f32 %v828, %v897
        %v930 = vadd.f32 %v829, %v898
        %v931 = vadd.f32 %v830, %v899
        %v932 = vadd.f32 %v831, %v900
        %v933 = vadd.f32 %v832, %v901
        %v934 = vadd.f32 %v833, %v902
        %v935 = vadd.f32 %v834, %v903
        %v936 = vadd.f32 %v835, %v904
        %v937 = vld [vmem:[%s500 + $0x1] sm:$0xff]
        %v938 = vld [vmem:[%s500 + $0x9] sm:$0xff]
        %v939 = vld [vmem:[%s500 + $0x19] sm:$0xff]
        %v940 = vld [vmem:[%s500 + $0x21] sm:$0xff]
        %v941 = vld [vmem:[%s500 + $0x31] sm:$0xff]
        %v942 = vld [vmem:[%s500 + $0x39] sm:$0xff]
        %v943 = vld [vmem:[%s500 + $0x49] sm:$0xff]
        %v944 = vld [vmem:[%s500 + $0x51] sm:$0xff]
        %v945 = vld [vmem:[%s500 + $0x61] sm:$0xff]
        %v946 = vld [vmem:[%s500 + $0x69] sm:$0xff]
        %v947 = vld [vmem:[%s500 + $0x79] sm:$0xff]
        %v948 = vld [vmem:[%s500 + $0x81] sm:$0xff]
        %v949 = vld [vmem:[%s500 + $0x91] sm:$0xff]
        %v950 = vld [vmem:[%s500 + $0x99] sm:$0xff]
        %v951 = vld [vmem:[%s500 + $0xa9] sm:$0xff]
        %v952 = vld [vmem:[%s500 + $0xb1] sm:$0xff]
        %v953 = vld [vmem:[%s500 + $0xc1] sm:$0xff]
        %v954 = vld [vmem:[%s500 + $0xc9] sm:$0xff]
        %v955 = vld [vmem:[%s500 + $0xd9] sm:$0xff]
        %v956 = vld [vmem:[%s500 + $0xe1] sm:$0xff]
        %v957 = vld [vmem:[%s500 + $0xf1] sm:$0xff]
        %v958 = vld [vmem:[%s500 + $0xf9] sm:$0xff]
        %v959 = vld [vmem:[%s500 + $0x109] sm:$0xff]
        %v960 = vld [vmem:[%s500 + $0x111] sm:$0xff]
        %v961 = vld [vmem:[%s500 + $0x121] sm:$0xff]
        %v962 = vld [vmem:[%s500 + $0x129] sm:$0xff]
        %v963 = vld [vmem:[%s500 + $0x139] sm:$0xff]
        %v964 = vld [vmem:[%s500 + $0x141] sm:$0xff]
        %v965 = vld [vmem:[%s500 + $0x151] sm:$0xff]
        %v966 = vld [vmem:[%s500 + $0x159] sm:$0xff]
        %v967 = vld [vmem:[%s500 + $0x169] sm:$0xff]
        %v968 = vld [vmem:[%s500 + $0x171] sm:$0xff]
        %v969 = vld [vmem:[#allocation8 + $0x5] sm:$0x1]
        %v970 = vlaneseq
        %v971 = vshrl.u32 %v970, 7
        %v972 = vsub.s32 0, %v971
        %v973 = vrot.slane %v969, %v972
        %v974 = vmul.f32 %v937, %v973
        %v975 = vmul.f32 %v938, %v973
        %v976 = vmul.f32 %v939, %v973
        %v977 = vmul.f32 %v940, %v973
        %v978 = vmul.f32 %v941, %v973
        %v979 = vmul.f32 %v942, %v973
        %v980 = vmul.f32 %v943, %v973
        %v981 = vmul.f32 %v944, %v973
        %v982 = vmul.f32 %v945, %v973
        %v983 = vmul.f32 %v946, %v973
        %v984 = vmul.f32 %v947, %v973
        %v985 = vmul.f32 %v948, %v973
        %v986 = vmul.f32 %v949, %v973
        %v987 = vmul.f32 %v950, %v973
        %v988 = vmul.f32 %v951, %v973
        %v989 = vmul.f32 %v952, %v973
        %v990 = vmul.f32 %v953, %v973
        %v991 = vmul.f32 %v954, %v973
        %v992 = vmul.f32 %v955, %v973
        %v993 = vmul.f32 %v956, %v973
        %v994 = vmul.f32 %v957, %v973
        %v995 = vmul.f32 %v958, %v973
        %v996 = vmul.f32 %v959, %v973
        %v997 = vmul.f32 %v960, %v973
        %v998 = vmul.f32 %v961, %v973
        %v999 = vmul.f32 %v962, %v973
        %v1000 = vmul.f32 %v963, %v973
        %v1001 = vmul.f32 %v964, %v973
        %v1002 = vmul.f32 %v965, %v973
        %v1003 = vmul.f32 %v966, %v973
        %v1004 = vmul.f32 %v967, %v973
        %v1005 = vmul.f32 %v968, %v973
        %v1006 = vadd.f32 %v905, %v974
        %v1007 = vadd.f32 %v906, %v975
        %v1008 = vadd.f32 %v907, %v976
        %v1009 = vadd.f32 %v908, %v977
        %v1010 = vadd.f32 %v909, %v978
        %v1011 = vadd.f32 %v910, %v979
        %v1012 = vadd.f32 %v911, %v980
        %v1013 = vadd.f32 %v912, %v981
        %v1014 = vadd.f32 %v913, %v982
        %v1015 = vadd.f32 %v914, %v983
        %v1016 = vadd.f32 %v915, %v984
        %v1017 = vadd.f32 %v916, %v985
        %v1018 = vadd.f32 %v917, %v986
        %v1019 = vadd.f32 %v918, %v987
        %v1020 = vadd.f32 %v919, %v988
        %v1021 = vadd.f32 %v920, %v989
        %v1022 = vadd.f32 %v921, %v990
        %v1023 = vadd.f32 %v922, %v991
        %v1024 = vadd.f32 %v923, %v992
        %v1025 = vadd.f32 %v924, %v993
        %v1026 = vadd.f32 %v925, %v994
        %v1027 = vadd.f32 %v926, %v995
        %v1028 = vadd.f32 %v927, %v996
        %v1029 = vadd.f32 %v928, %v997
        %v1030 = vadd.f32 %v929, %v998
        %v1031 = vadd.f32 %v930, %v999
        %v1032 = vadd.f32 %v931, %v1000
        %v1033 = vadd.f32 %v932, %v1001
        %v1034 = vadd.f32 %v933, %v1002
        %v1035 = vadd.f32 %v934, %v1003
        %v1036 = vadd.f32 %v935, %v1004
        %v1037 = vadd.f32 %v936, %v1005
        %v1038 = vld [vmem:[%s500 + $0x2] sm:$0xff]
        %v1039 = vld [vmem:[%s500 + $0xa] sm:$0xff]
        %v1040 = vld [vmem:[%s500 + $0x1a] sm:$0xff]
        %v1041 = vld [vmem:[%s500 + $0x22] sm:$0xff]
        %v1042 = vld [vmem:[%s500 + $0x32] sm:$0xff]
        %v1043 = vld [vmem:[%s500 + $0x3a] sm:$0xff]
        %v1044 = vld [vmem:[%s500 + $0x4a] sm:$0xff]
        %v1045 = vld [vmem:[%s500 + $0x52] sm:$0xff]
        %v1046 = vld [vmem:[%s500 + $0x62] sm:$0xff]
        %v1047 = vld [vmem:[%s500 + $0x6a] sm:$0xff]
        %v1048 = vld [vmem:[%s500 + $0x7a] sm:$0xff]
        %v1049 = vld [vmem:[%s500 + $0x82] sm:$0xff]
        %v1050 = vld [vmem:[%s500 + $0x92] sm:$0xff]
        %v1051 = vld [vmem:[%s500 + $0x9a] sm:$0xff]
        %v1052 = vld [vmem:[%s500 + $0xaa] sm:$0xff]
        %v1053 = vld [vmem:[%s500 + $0xb2] sm:$0xff]
        %v1054 = vld [vmem:[%s500 + $0xc2] sm:$0xff]
        %v1055 = vld [vmem:[%s500 + $0xca] sm:$0xff]
        %v1056 = vld [vmem:[%s500 + $0xda] sm:$0xff]
        %v1057 = vld [vmem:[%s500 + $0xe2] sm:$0xff]
        %v1058 = vld [vmem:[%s500 + $0xf2] sm:$0xff]
        %v1059 = vld [vmem:[%s500 + $0xfa] sm:$0xff]
        %v1060 = vld [vmem:[%s500 + $0x10a] sm:$0xff]
        %v1061 = vld [vmem:[%s500 + $0x112] sm:$0xff]
        %v1062 = vld [vmem:[%s500 + $0x122] sm:$0xff]
        %v1063 = vld [vmem:[%s500 + $0x12a] sm:$0xff]
        %v1064 = vld [vmem:[%s500 + $0x13a] sm:$0xff]
        %v1065 = vld [vmem:[%s500 + $0x142] sm:$0xff]
        %v1066 = vld [vmem:[%s500 + $0x152] sm:$0xff]
        %v1067 = vld [vmem:[%s500 + $0x15a] sm:$0xff]
        %v1068 = vld [vmem:[%s500 + $0x16a] sm:$0xff]
        %v1069 = vld [vmem:[%s500 + $0x172] sm:$0xff]
        %v1070 = vld [vmem:[#allocation8 + $0x6] sm:$0x1]
        %v1071 = vlaneseq
        %v1072 = vshrl.u32 %v1071, 7
        %v1073 = vsub.s32 0, %v1072
        %v1074 = vrot.slane %v1070, %v1073
        %v1075 = vmul.f32 %v1038, %v1074
        %v1076 = vmul.f32 %v1039, %v1074
        %v1077 = vmul.f32 %v1040, %v1074
        %v1078 = vmul.f32 %v1041, %v1074
        %v1079 = vmul.f32 %v1042, %v1074
        %v1080 = vmul.f32 %v1043, %v1074
        %v1081 = vmul.f32 %v1044, %v1074
        %v1082 = vmul.f32 %v1045, %v1074
        %v1083 = vmul.f32 %v1046, %v1074
        %v1084 = vmul.f32 %v1047, %v1074
        %v1085 = vmul.f32 %v1048, %v1074
        %v1086 = vmul.f32 %v1049, %v1074
        %v1087 = vmul.f32 %v1050, %v1074
        %v1088 = vmul.f32 %v1051, %v1074
        %v1089 = vmul.f32 %v1052, %v1074
        %v1090 = vmul.f32 %v1053, %v1074
        %v1091 = vmul.f32 %v1054, %v1074
        %v1092 = vmul.f32 %v1055, %v1074
        %v1093 = vmul.f32 %v1056, %v1074
        %v1094 = vmul.f32 %v1057, %v1074
        %v1095 = vmul.f32 %v1058, %v1074
        %v1096 = vmul.f32 %v1059, %v1074
        %v1097 = vmul.f32 %v1060, %v1074
        %v1098 = vmul.f32 %v1061, %v1074
        %v1099 = vmul.f32 %v1062, %v1074
        %v1100 = vmul.f32 %v1063, %v1074
        %v1101 = vmul.f32 %v1064, %v1074
        %v1102 = vmul.f32 %v1065, %v1074
        %v1103 = vmul.f32 %v1066, %v1074
        %v1104 = vmul.f32 %v1067, %v1074
        %v1105 = vmul.f32 %v1068, %v1074
        %v1106 = vmul.f32 %v1069, %v1074
        %v1107 = vadd.f32 %v1006, %v1075
        %v1108 = vadd.f32 %v1007, %v1076
        %v1109 = vadd.f32 %v1008, %v1077
        %v1110 = vadd.f32 %v1009, %v1078
        %v1111 = vadd.f32 %v1010, %v1079
        %v1112 = vadd.f32 %v1011, %v1080
        %v1113 = vadd.f32 %v1012, %v1081
        %v1114 = vadd.f32 %v1013, %v1082
        %v1115 = vadd.f32 %v1014, %v1083
        %v1116 = vadd.f32 %v1015, %v1084
        %v1117 = vadd.f32 %v1016, %v1085
        %v1118 = vadd.f32 %v1017, %v1086
        %v1119 = vadd.f32 %v1018, %v1087
        %v1120 = vadd.f32 %v1019, %v1088
        %v1121 = vadd.f32 %v1020, %v1089
        %v1122 = vadd.f32 %v1021, %v1090
        %v1123 = vadd.f32 %v1022, %v1091
        %v1124 = vadd.f32 %v1023, %v1092
        %v1125 = vadd.f32 %v1024, %v1093
        %v1126 = vadd.f32 %v1025, %v1094
        %v1127 = vadd.f32 %v1026, %v1095
        %v1128 = vadd.f32 %v1027, %v1096
        %v1129 = vadd.f32 %v1028, %v1097
        %v1130 = vadd.f32 %v1029, %v1098
        %v1131 = vadd.f32 %v1030, %v1099
        %v1132 = vadd.f32 %v1031, %v1100
        %v1133 = vadd.f32 %v1032, %v1101
        %v1134 = vadd.f32 %v1033, %v1102
        %v1135 = vadd.f32 %v1034, %v1103
        %v1136 = vadd.f32 %v1035, %v1104
        %v1137 = vadd.f32 %v1036, %v1105
        %v1138 = vadd.f32 %v1037, %v1106
        %s1139 = scalar_lea.vmem [#allocation2], 48
        %v1140 = vld [vmem:[%s1139] sm:$0xff]
        %v1141 = vld [vmem:[%s1139 + $0x8] sm:$0xff]
        %v1142 = vld [vmem:[%s1139 + $0x18] sm:$0xff]
        %v1143 = vld [vmem:[%s1139 + $0x20] sm:$0xff]
        %v1144 = vld [vmem:[%s1139 + $0x30] sm:$0xff]
        %v1145 = vld [vmem:[%s1139 + $0x38] sm:$0xff]
        %v1146 = vld [vmem:[%s1139 + $0x48] sm:$0xff]
        %v1147 = vld [vmem:[%s1139 + $0x50] sm:$0xff]
        %v1148 = vld [vmem:[%s1139 + $0x60] sm:$0xff]
        %v1149 = vld [vmem:[%s1139 + $0x68] sm:$0xff]
        %v1150 = vld [vmem:[%s1139 + $0x78] sm:$0xff]
        %v1151 = vld [vmem:[%s1139 + $0x80] sm:$0xff]
        %v1152 = vld [vmem:[%s1139 + $0x90] sm:$0xff]
        %v1153 = vld [vmem:[%s1139 + $0x98] sm:$0xff]
        %v1154 = vld [vmem:[%s1139 + $0xa8] sm:$0xff]
        %v1155 = vld [vmem:[%s1139 + $0xb0] sm:$0xff]
        %v1156 = vld [vmem:[%s1139 + $0xc0] sm:$0xff]
        %v1157 = vld [vmem:[%s1139 + $0xc8] sm:$0xff]
        %v1158 = vld [vmem:[%s1139 + $0xd8] sm:$0xff]
        %v1159 = vld [vmem:[%s1139 + $0xe0] sm:$0xff]
        %v1160 = vld [vmem:[%s1139 + $0xf0] sm:$0xff]
        %v1161 = vld [vmem:[%s1139 + $0xf8] sm:$0xff]
        %v1162 = vld [vmem:[%s1139 + $0x108] sm:$0xff]
        %v1163 = vld [vmem:[%s1139 + $0x110] sm:$0xff]
        %v1164 = vld [vmem:[%s1139 + $0x120] sm:$0xff]
        %v1165 = vld [vmem:[%s1139 + $0x128] sm:$0xff]
        %v1166 = vld [vmem:[%s1139 + $0x138] sm:$0xff]
        %v1167 = vld [vmem:[%s1139 + $0x140] sm:$0xff]
        %v1168 = vld [vmem:[%s1139 + $0x150] sm:$0xff]
        %v1169 = vld [vmem:[%s1139 + $0x158] sm:$0xff]
        %v1170 = vld [vmem:[%s1139 + $0x168] sm:$0xff]
        %v1171 = vld [vmem:[%s1139 + $0x170] sm:$0xff]
        %v1172 = vld [vmem:[#allocation8 + $0x7] sm:$0x1]
        %v1173 = vlaneseq
        %v1174 = vshrl.u32 %v1173, 7
        %v1175 = vsub.s32 0, %v1174
        %v1176 = vrot.slane %v1172, %v1175
        %v1177 = vmul.f32 %v1140, %v1176
        %v1178 = vmul.f32 %v1141, %v1176
        %v1179 = vmul.f32 %v1142, %v1176
        %v1180 = vmul.f32 %v1143, %v1176
        %v1181 = vmul.f32 %v1144, %v1176
        %v1182 = vmul.f32 %v1145, %v1176
        %v1183 = vmul.f32 %v1146, %v1176
        %v1184 = vmul.f32 %v1147, %v1176
        %v1185 = vmul.f32 %v1148, %v1176
        %v1186 = vmul.f32 %v1149, %v1176
        %v1187 = vmul.f32 %v1150, %v1176
        %v1188 = vmul.f32 %v1151, %v1176
        %v1189 = vmul.f32 %v1152, %v1176
        %v1190 = vmul.f32 %v1153, %v1176
        %v1191 = vmul.f32 %v1154, %v1176
        %v1192 = vmul.f32 %v1155, %v1176
        %v1193 = vmul.f32 %v1156, %v1176
        %v1194 = vmul.f32 %v1157, %v1176
        %v1195 = vmul.f32 %v1158, %v1176
        %v1196 = vmul.f32 %v1159, %v1176
        %v1197 = vmul.f32 %v1160, %v1176
        %v1198 = vmul.f32 %v1161, %v1176
        %v1199 = vmul.f32 %v1162, %v1176
        %v1200 = vmul.f32 %v1163, %v1176
        %v1201 = vmul.f32 %v1164, %v1176
        %v1202 = vmul.f32 %v1165, %v1176
        %v1203 = vmul.f32 %v1166, %v1176
        %v1204 = vmul.f32 %v1167, %v1176
        %v1205 = vmul.f32 %v1168, %v1176
        %v1206 = vmul.f32 %v1169, %v1176
        %v1207 = vmul.f32 %v1170, %v1176
        %v1208 = vmul.f32 %v1171, %v1176
        %v1209 = vadd.f32 %v1107, %v1177
        %v1210 = vadd.f32 %v1108, %v1178
        %v1211 = vadd.f32 %v1109, %v1179
        %v1212 = vadd.f32 %v1110, %v1180
        %v1213 = vadd.f32 %v1111, %v1181
        %v1214 = vadd.f32 %v1112, %v1182
        %v1215 = vadd.f32 %v1113, %v1183
        %v1216 = vadd.f32 %v1114, %v1184
        %v1217 = vadd.f32 %v1115, %v1185
        %v1218 = vadd.f32 %v1116, %v1186
        %v1219 = vadd.f32 %v1117, %v1187
        %v1220 = vadd.f32 %v1118, %v1188
        %v1221 = vadd.f32 %v1119, %v1189
        %v1222 = vadd.f32 %v1120, %v1190
        %v1223 = vadd.f32 %v1121, %v1191
        %v1224 = vadd.f32 %v1122, %v1192
        %v1225 = vadd.f32 %v1123, %v1193
        %v1226 = vadd.f32 %v1124, %v1194
        %v1227 = vadd.f32 %v1125, %v1195
        %v1228 = vadd.f32 %v1126, %v1196
        %v1229 = vadd.f32 %v1127, %v1197
        %v1230 = vadd.f32 %v1128, %v1198
        %v1231 = vadd.f32 %v1129, %v1199
        %v1232 = vadd.f32 %v1130, %v1200
        %v1233 = vadd.f32 %v1131, %v1201
        %v1234 = vadd.f32 %v1132, %v1202
        %v1235 = vadd.f32 %v1133, %v1203
        %v1236 = vadd.f32 %v1134, %v1204
        %v1237 = vadd.f32 %v1135, %v1205
        %v1238 = vadd.f32 %v1136, %v1206
        %v1239 = vadd.f32 %v1137, %v1207
        %v1240 = vadd.f32 %v1138, %v1208
        %v1241 = vld [vmem:[%s1139 + $0x1] sm:$0xff]
        %v1242 = vld [vmem:[%s1139 + $0x9] sm:$0xff]
        %v1243 = vld [vmem:[%s1139 + $0x19] sm:$0xff]
        %v1244 = vld [vmem:[%s1139 + $0x21] sm:$0xff]
        %v1245 = vld [vmem:[%s1139 + $0x31] sm:$0xff]
        %v1246 = vld [vmem:[%s1139 + $0x39] sm:$0xff]
        %v1247 = vld [vmem:[%s1139 + $0x49] sm:$0xff]
        %v1248 = vld [vmem:[%s1139 + $0x51] sm:$0xff]
        %v1249 = vld [vmem:[%s1139 + $0x61] sm:$0xff]
        %v1250 = vld [vmem:[%s1139 + $0x69] sm:$0xff]
        %v1251 = vld [vmem:[%s1139 + $0x79] sm:$0xff]
        %v1252 = vld [vmem:[%s1139 + $0x81] sm:$0xff]
        %v1253 = vld [vmem:[%s1139 + $0x91] sm:$0xff]
        %v1254 = vld [vmem:[%s1139 + $0x99] sm:$0xff]
        %v1255 = vld [vmem:[%s1139 + $0xa9] sm:$0xff]
        %v1256 = vld [vmem:[%s1139 + $0xb1] sm:$0xff]
        %v1257 = vld [vmem:[%s1139 + $0xc1] sm:$0xff]
        %v1258 = vld [vmem:[%s1139 + $0xc9] sm:$0xff]
        %v1259 = vld [vmem:[%s1139 + $0xd9] sm:$0xff]
        %v1260 = vld [vmem:[%s1139 + $0xe1] sm:$0xff]
        %v1261 = vld [vmem:[%s1139 + $0xf1] sm:$0xff]
        %v1262 = vld [vmem:[%s1139 + $0xf9] sm:$0xff]
        %v1263 = vld [vmem:[%s1139 + $0x109] sm:$0xff]
        %v1264 = vld [vmem:[%s1139 + $0x111] sm:$0xff]
        %v1265 = vld [vmem:[%s1139 + $0x121] sm:$0xff]
        %v1266 = vld [vmem:[%s1139 + $0x129] sm:$0xff]
        %v1267 = vld [vmem:[%s1139 + $0x139] sm:$0xff]
        %v1268 = vld [vmem:[%s1139 + $0x141] sm:$0xff]
        %v1269 = vld [vmem:[%s1139 + $0x151] sm:$0xff]
        %v1270 = vld [vmem:[%s1139 + $0x159] sm:$0xff]
        %v1271 = vld [vmem:[%s1139 + $0x169] sm:$0xff]
        %v1272 = vld [vmem:[%s1139 + $0x171] sm:$0xff]
        %v1273 = vld [vmem:[#allocation8 + $0x8] sm:$0x1]
        %v1274 = vlaneseq
        %v1275 = vshrl.u32 %v1274, 7
        %v1276 = vsub.s32 0, %v1275
        %v1277 = vrot.slane %v1273, %v1276
        %v1278 = vmul.f32 %v1241, %v1277
        %v1279 = vmul.f32 %v1242, %v1277
        %v1280 = vmul.f32 %v1243, %v1277
        %v1281 = vmul.f32 %v1244, %v1277
        %v1282 = vmul.f32 %v1245, %v1277
        %v1283 = vmul.f32 %v1246, %v1277
        %v1284 = vmul.f32 %v1247, %v1277
        %v1285 = vmul.f32 %v1248, %v1277
        %v1286 = vmul.f32 %v1249, %v1277
        %v1287 = vmul.f32 %v1250, %v1277
        %v1288 = vmul.f32 %v1251, %v1277
        %v1289 = vmul.f32 %v1252, %v1277
        %v1290 = vmul.f32 %v1253, %v1277
        %v1291 = vmul.f32 %v1254, %v1277
        %v1292 = vmul.f32 %v1255, %v1277
        %v1293 = vmul.f32 %v1256, %v1277
        %v1294 = vmul.f32 %v1257, %v1277
        %v1295 = vmul.f32 %v1258, %v1277
        %v1296 = vmul.f32 %v1259, %v1277
        %v1297 = vmul.f32 %v1260, %v1277
        %v1298 = vmul.f32 %v1261, %v1277
        %v1299 = vmul.f32 %v1262, %v1277
        %v1300 = vmul.f32 %v1263, %v1277
        %v1301 = vmul.f32 %v1264, %v1277
        %v1302 = vmul.f32 %v1265, %v1277
        %v1303 = vmul.f32 %v1266, %v1277
        %v1304 = vmul.f32 %v1267, %v1277
        %v1305 = vmul.f32 %v1268, %v1277
        %v1306 = vmul.f32 %v1269, %v1277
        %v1307 = vmul.f32 %v1270, %v1277
        %v1308 = vmul.f32 %v1271, %v1277
        %v1309 = vmul.f32 %v1272, %v1277
        %v1310 = vadd.f32 %v1209, %v1278
        %v1311 = vadd.f32 %v1210, %v1279
        %v1312 = vadd.f32 %v1211, %v1280
        %v1313 = vadd.f32 %v1212, %v1281
        %v1314 = vadd.f32 %v1213, %v1282
        %v1315 = vadd.f32 %v1214, %v1283
        %v1316 = vadd.f32 %v1215, %v1284
        %v1317 = vadd.f32 %v1216, %v1285
        %v1318 = vadd.f32 %v1217, %v1286
        %v1319 = vadd.f32 %v1218, %v1287
        %v1320 = vadd.f32 %v1219, %v1288
        %v1321 = vadd.f32 %v1220, %v1289
        %v1322 = vadd.f32 %v1221, %v1290
        %v1323 = vadd.f32 %v1222, %v1291
        %v1324 = vadd.f32 %v1223, %v1292
        %v1325 = vadd.f32 %v1224, %v1293
        %v1326 = vadd.f32 %v1225, %v1294
        %v1327 = vadd.f32 %v1226, %v1295
        %v1328 = vadd.f32 %v1227, %v1296
        %v1329 = vadd.f32 %v1228, %v1297
        %v1330 = vadd.f32 %v1229, %v1298
        %v1331 = vadd.f32 %v1230, %v1299
        %v1332 = vadd.f32 %v1231, %v1300
        %v1333 = vadd.f32 %v1232, %v1301
        %v1334 = vadd.f32 %v1233, %v1302
        %v1335 = vadd.f32 %v1234, %v1303
        %v1336 = vadd.f32 %v1235, %v1304
        %v1337 = vadd.f32 %v1236, %v1305
        %v1338 = vadd.f32 %v1237, %v1306
        %v1339 = vadd.f32 %v1238, %v1307
        %v1340 = vadd.f32 %v1239, %v1308
        %v1341 = vadd.f32 %v1240, %v1309
        %v1342 = vld [vmem:[%s1139 + $0x2] sm:$0xff]
        %v1343 = vld [vmem:[%s1139 + $0xa] sm:$0xff]
        %v1344 = vld [vmem:[%s1139 + $0x1a] sm:$0xff]
        %v1345 = vld [vmem:[%s1139 + $0x22] sm:$0xff]
        %v1346 = vld [vmem:[%s1139 + $0x32] sm:$0xff]
        %v1347 = vld [vmem:[%s1139 + $0x3a] sm:$0xff]
        %v1348 = vld [vmem:[%s1139 + $0x4a] sm:$0xff]
        %v1349 = vld [vmem:[%s1139 + $0x52] sm:$0xff]
        %v1350 = vld [vmem:[%s1139 + $0x62] sm:$0xff]
        %v1351 = vld [vmem:[%s1139 + $0x6a] sm:$0xff]
        %v1352 = vld [vmem:[%s1139 + $0x7a] sm:$0xff]
        %v1353 = vld [vmem:[%s1139 + $0x82] sm:$0xff]
        %v1354 = vld [vmem:[%s1139 + $0x92] sm:$0xff]
        %v1355 = vld [vmem:[%s1139 + $0x9a] sm:$0xff]
        %v1356 = vld [vmem:[%s1139 + $0xaa] sm:$0xff]
        %v1357 = vld [vmem:[%s1139 + $0xb2] sm:$0xff]
        %v1358 = vld [vmem:[%s1139 + $0xc2] sm:$0xff]
        %v1359 = vld [vmem:[%s1139 + $0xca] sm:$0xff]
        %v1360 = vld [vmem:[%s1139 + $0xda] sm:$0xff]
        %v1361 = vld [vmem:[%s1139 + $0xe2] sm:$0xff]
        %v1362 = vld [vmem:[%s1139 + $0xf2] sm:$0xff]
        %v1363 = vld [vmem:[%s1139 + $0xfa] sm:$0xff]
        %v1364 = vld [vmem:[%s1139 + $0x10a] sm:$0xff]
        %v1365 = vld [vmem:[%s1139 + $0x112] sm:$0xff]
        %v1366 = vld [vmem:[%s1139 + $0x122] sm:$0xff]
        %v1367 = vld [vmem:[%s1139 + $0x12a] sm:$0xff]
        %v1368 = vld [vmem:[%s1139 + $0x13a] sm:$0xff]
        %v1369 = vld [vmem:[%s1139 + $0x142] sm:$0xff]
        %v1370 = vld [vmem:[%s1139 + $0x152] sm:$0xff]
        %v1371 = vld [vmem:[%s1139 + $0x15a] sm:$0xff]
        %v1372 = vld [vmem:[%s1139 + $0x16a] sm:$0xff]
        %v1373 = vld [vmem:[%s1139 + $0x172] sm:$0xff]
        %v1374 = vld [vmem:[#allocation8 + $0x9] sm:$0x1]
        %v1375 = vlaneseq
        %v1376 = vshrl.u32 %v1375, 7
        %v1377 = vsub.s32 0, %v1376
        %v1378 = vrot.slane %v1374, %v1377
        %v1379 = vmul.f32 %v1342, %v1378
        %v1380 = vmul.f32 %v1343, %v1378
        %v1381 = vmul.f32 %v1344, %v1378
        %v1382 = vmul.f32 %v1345, %v1378
        %v1383 = vmul.f32 %v1346, %v1378
        %v1384 = vmul.f32 %v1347, %v1378
        %v1385 = vmul.f32 %v1348, %v1378
        %v1386 = vmul.f32 %v1349, %v1378
        %v1387 = vmul.f32 %v1350, %v1378
        %v1388 = vmul.f32 %v1351, %v1378
        %v1389 = vmul.f32 %v1352, %v1378
        %v1390 = vmul.f32 %v1353, %v1378
        %v1391 = vmul.f32 %v1354, %v1378
        %v1392 = vmul.f32 %v1355, %v1378
        %v1393 = vmul.f32 %v1356, %v1378
        %v1394 = vmul.f32 %v1357, %v1378
        %v1395 = vmul.f32 %v1358, %v1378
        %v1396 = vmul.f32 %v1359, %v1378
        %v1397 = vmul.f32 %v1360, %v1378
        %v1398 = vmul.f32 %v1361, %v1378
        %v1399 = vmul.f32 %v1362, %v1378
        %v1400 = vmul.f32 %v1363, %v1378
        %v1401 = vmul.f32 %v1364, %v1378
        %v1402 = vmul.f32 %v1365, %v1378
        %v1403 = vmul.f32 %v1366, %v1378
        %v1404 = vmul.f32 %v1367, %v1378
        %v1405 = vmul.f32 %v1368, %v1378
        %v1406 = vmul.f32 %v1369, %v1378
        %v1407 = vmul.f32 %v1370, %v1378
        %v1408 = vmul.f32 %v1371, %v1378
        %v1409 = vmul.f32 %v1372, %v1378
        %v1410 = vmul.f32 %v1373, %v1378
        %v1411 = vadd.f32 %v1310, %v1379
        %v1412 = vadd.f32 %v1311, %v1380
        %v1413 = vadd.f32 %v1312, %v1381
        %v1414 = vadd.f32 %v1313, %v1382
        %v1415 = vadd.f32 %v1314, %v1383
        %v1416 = vadd.f32 %v1315, %v1384
        %v1417 = vadd.f32 %v1316, %v1385
        %v1418 = vadd.f32 %v1317, %v1386
        %v1419 = vadd.f32 %v1318, %v1387
        %v1420 = vadd.f32 %v1319, %v1388
        %v1421 = vadd.f32 %v1320, %v1389
        %v1422 = vadd.f32 %v1321, %v1390
        %v1423 = vadd.f32 %v1322, %v1391
        %v1424 = vadd.f32 %v1323, %v1392
        %v1425 = vadd.f32 %v1324, %v1393
        %v1426 = vadd.f32 %v1325, %v1394
        %v1427 = vadd.f32 %v1326, %v1395
        %v1428 = vadd.f32 %v1327, %v1396
        %v1429 = vadd.f32 %v1328, %v1397
        %v1430 = vadd.f32 %v1329, %v1398
        %v1431 = vadd.f32 %v1330, %v1399
        %v1432 = vadd.f32 %v1331, %v1400
        %v1433 = vadd.f32 %v1332, %v1401
        %v1434 = vadd.f32 %v1333, %v1402
        %v1435 = vadd.f32 %v1334, %v1403
        %v1436 = vadd.f32 %v1335, %v1404
        %v1437 = vadd.f32 %v1336, %v1405
        %v1438 = vadd.f32 %v1337, %v1406
        %v1439 = vadd.f32 %v1338, %v1407
        %v1440 = vadd.f32 %v1339, %v1408
        %v1441 = vadd.f32 %v1340, %v1409
        %v1442 = vadd.f32 %v1341, %v1410
        %v1443 = vld [vmem:[#allocation8 + $0xa] sm:$0x1]
        %v1444 = vmul.f32 %v1443, %v444
        %v1445 = vld [vmem:[#allocation8 + $0xb] sm:$0x1]
        %vm1446 = vcmask 450560
        %v1447 = vsel %vm1446, %v1445, 0.0
        %1448 = vadd.xlane.f32.xlu0 %v1447
        %v1449 = vpop.xlane.xlu0 %1448
        %v1450 = vlaneseq
        %v1451 = vshrl.u32 %v1450, 7
        %v1452 = vsub.s32 0, %v1451
        %v1453 = vrot.slane %v1444, %v1452
        %v1454 = vmul.f32 %v1411, %v1453
        %v1455 = vmul.f32 %v1412, %v1453
        %v1456 = vmul.f32 %v1413, %v1453
        %v1457 = vmul.f32 %v1414, %v1453
        %v1458 = vmul.f32 %v1415, %v1453
        %v1459 = vmul.f32 %v1416, %v1453
        %v1460 = vmul.f32 %v1417, %v1453
        %v1461 = vmul.f32 %v1418, %v1453
        %v1462 = vmul.f32 %v1419, %v1453
        %v1463 = vmul.f32 %v1420, %v1453
        %v1464 = vmul.f32 %v1421, %v1453
        %v1465 = vmul.f32 %v1422, %v1453
        %v1466 = vmul.f32 %v1423, %v1453
        %v1467 = vmul.f32 %v1424, %v1453
        %v1468 = vmul.f32 %v1425, %v1453
        %v1469 = vmul.f32 %v1426, %v1453
        %v1470 = vmul.f32 %v1427, %v1453
        %v1471 = vmul.f32 %v1428, %v1453
        %v1472 = vmul.f32 %v1429, %v1453
        %v1473 = vmul.f32 %v1430, %v1453
        %v1474 = vmul.f32 %v1431, %v1453
        %v1475 = vmul.f32 %v1432, %v1453
        %v1476 = vmul.f32 %v1433, %v1453
        %v1477 = vmul.f32 %v1434, %v1453
        %v1478 = vmul.f32 %v1435, %v1453
        %v1479 = vmul.f32 %v1436, %v1453
        %v1480 = vmul.f32 %v1437, %v1453
        %v1481 = vmul.f32 %v1438, %v1453
        %v1482 = vmul.f32 %v1439, %v1453
        %v1483 = vmul.f32 %v1440, %v1453
        %v1484 = vmul.f32 %v1441, %v1453
        %v1485 = vmul.f32 %v1442, %v1453
        %v1486 = vsel %vm287, %v1454, 0.0
        %1487 = vadd.xlane.f32.xlu0 %v1486
        %v1488 = vpop.xlane.xlu0 %1487
        %v1489 = vsel %vm287, %v1455, 0.0
        %1490 = vadd.xlane.f32.xlu0 %v1489
        %v1491 = vpop.xlane.xlu0 %1490
        %v1492 = vsel %vm287, %v1456, 0.0
        %1493 = vadd.xlane.f32.xlu0 %v1492
        %v1494 = vpop.xlane.xlu0 %1493
        %v1495 = vsel %vm287, %v1457, 0.0
        %1496 = vadd.xlane.f32.xlu0 %v1495
        %v1497 = vpop.xlane.xlu0 %1496
        %v1498 = vsel %vm287, %v1458, 0.0
        %1499 = vadd.xlane.f32.xlu0 %v1498
        %v1500 = vpop.xlane.xlu0 %1499
        %v1501 = vsel %vm287, %v1459, 0.0
        %1502 = vadd.xlane.f32.xlu0 %v1501
        %v1503 = vpop.xlane.xlu0 %1502
        %v1504 = vsel %vm287, %v1460, 0.0
        %1505 = vadd.xlane.f32.xlu0 %v1504
        %v1506 = vpop.xlane.xlu0 %1505
        %v1507 = vsel %vm287, %v1461, 0.0
        %1508 = vadd.xlane.f32.xlu0 %v1507
        %v1509 = vpop.xlane.xlu0 %1508
        %v1510 = vsel %vm287, %v1462, 0.0
        %1511 = vadd.xlane.f32.xlu0 %v1510
        %v1512 = vpop.xlane.xlu0 %1511
        %v1513 = vsel %vm287, %v1463, 0.0
        %1514 = vadd.xlane.f32.xlu0 %v1513
        %v1515 = vpop.xlane.xlu0 %1514
        %v1516 = vsel %vm287, %v1464, 0.0
        %1517 = vadd.xlane.f32.xlu0 %v1516
        %v1518 = vpop.xlane.xlu0 %1517
        %v1519 = vsel %vm287, %v1465, 0.0
        %1520 = vadd.xlane.f32.xlu0 %v1519
        %v1521 = vpop.xlane.xlu0 %1520
        %v1522 = vsel %vm287, %v1466, 0.0
        %1523 = vadd.xlane.f32.xlu0 %v1522
        %v1524 = vpop.xlane.xlu0 %1523
        %v1525 = vsel %vm287, %v1467, 0.0
        %1526 = vadd.xlane.f32.xlu0 %v1525
        %v1527 = vpop.xlane.xlu0 %1526
        %v1528 = vsel %vm287, %v1468, 0.0
        %1529 = vadd.xlane.f32.xlu0 %v1528
        %v1530 = vpop.xlane.xlu0 %1529
        %v1531 = vsel %vm287, %v1469, 0.0
        %1532 = vadd.xlane.f32.xlu0 %v1531
        %v1533 = vpop.xlane.xlu0 %1532
        %v1534 = vsel %vm287, %v1470, 0.0
        %1535 = vadd.xlane.f32.xlu0 %v1534
        %v1536 = vpop.xlane.xlu0 %1535
        %v1537 = vsel %vm287, %v1471, 0.0
        %1538 = vadd.xlane.f32.xlu0 %v1537
        %v1539 = vpop.xlane.xlu0 %1538
        %v1540 = vsel %vm287, %v1472, 0.0
        %1541 = vadd.xlane.f32.xlu0 %v1540
        %v1542 = vpop.xlane.xlu0 %1541
        %v1543 = vsel %vm287, %v1473, 0.0
        %1544 = vadd.xlane.f32.xlu0 %v1543
        %v1545 = vpop.xlane.xlu0 %1544
        %v1546 = vsel %vm287, %v1474, 0.0
        %1547 = vadd.xlane.f32.xlu0 %v1546
        %v1548 = vpop.xlane.xlu0 %1547
        %v1549 = vsel %vm287, %v1475, 0.0
        %1550 = vadd.xlane.f32.xlu0 %v1549
        %v1551 = vpop.xlane.xlu0 %1550
        %v1552 = vsel %vm287, %v1476, 0.0
        %1553 = vadd.xlane.f32.xlu0 %v1552
        %v1554 = vpop.xlane.xlu0 %1553
        %v1555 = vsel %vm287, %v1477, 0.0
        %1556 = vadd.xlane.f32.xlu0 %v1555
        %v1557 = vpop.xlane.xlu0 %1556
        %v1558 = vsel %vm287, %v1478, 0.0
        %1559 = vadd.xlane.f32.xlu0 %v1558
        %v1560 = vpop.xlane.xlu0 %1559
        %v1561 = vsel %vm287, %v1479, 0.0
        %1562 = vadd.xlane.f32.xlu0 %v1561
        %v1563 = vpop.xlane.xlu0 %1562
        %v1564 = vsel %vm287, %v1480, 0.0
        %1565 = vadd.xlane.f32.xlu0 %v1564
        %v1566 = vpop.xlane.xlu0 %1565
        %v1567 = vsel %vm287, %v1481, 0.0
        %1568 = vadd.xlane.f32.xlu0 %v1567
        %v1569 = vpop.xlane.xlu0 %1568
        %v1570 = vsel %vm287, %v1482, 0.0
        %1571 = vadd.xlane.f32.xlu0 %v1570
        %v1572 = vpop.xlane.xlu0 %1571
        %v1573 = vsel %vm287, %v1483, 0.0
        %1574 = vadd.xlane.f32.xlu0 %v1573
        %v1575 = vpop.xlane.xlu0 %1574
        %v1576 = vsel %vm287, %v1484, 0.0
        %1577 = vadd.xlane.f32.xlu0 %v1576
        %v1578 = vpop.xlane.xlu0 %1577
        %v1579 = vsel %vm287, %v1485, 0.0
        %1580 = vadd.xlane.f32.xlu0 %v1579
        %v1581 = vpop.xlane.xlu0 %1580
        %v1582 = vlaneseq
        %v1583 = vshrl.u32 %v1582, 7
        %v1584 = vsub.s32 0, %v1583
        %v1585 = vrot.slane %v1449, %v1584
        %v1586 = vadd.f32 %v1488, %v1585
        %v1587 = vadd.f32 %v1491, %v1585
        %v1588 = vadd.f32 %v1494, %v1585
        %v1589 = vadd.f32 %v1497, %v1585
        %v1590 = vadd.f32 %v1500, %v1585
        %v1591 = vadd.f32 %v1503, %v1585
        %v1592 = vadd.f32 %v1506, %v1585
        %v1593 = vadd.f32 %v1509, %v1585
        %v1594 = vadd.f32 %v1512, %v1585
        %v1595 = vadd.f32 %v1515, %v1585
        %v1596 = vadd.f32 %v1518, %v1585
        %v1597 = vadd.f32 %v1521, %v1585
        %v1598 = vadd.f32 %v1524, %v1585
        %v1599 = vadd.f32 %v1527, %v1585
        %v1600 = vadd.f32 %v1530, %v1585
        %v1601 = vadd.f32 %v1533, %v1585
        %v1602 = vadd.f32 %v1536, %v1585
        %v1603 = vadd.f32 %v1539, %v1585
        %v1604 = vadd.f32 %v1542, %v1585
        %v1605 = vadd.f32 %v1545, %v1585
        %v1606 = vadd.f32 %v1548, %v1585
        %v1607 = vadd.f32 %v1551, %v1585
        %v1608 = vadd.f32 %v1554, %v1585
        %v1609 = vadd.f32 %v1557, %v1585
        %v1610 = vadd.f32 %v1560, %v1585
        %v1611 = vadd.f32 %v1563, %v1585
        %v1612 = vadd.f32 %v1566, %v1585
        %v1613 = vadd.f32 %v1569, %v1585
        %v1614 = vadd.f32 %v1572, %v1585
        %v1615 = vadd.f32 %v1575, %v1585
        %v1616 = vadd.f32 %v1578, %v1585
        %v1617 = vadd.f32 %v1581, %v1585
        %v1618 = vsub.f32 0.0, %v1586
        %v1619 = vsub.f32 0.0, %v1587
        %v1620 = vsub.f32 0.0, %v1588
        %v1621 = vsub.f32 0.0, %v1589
        %v1622 = vsub.f32 0.0, %v1590
        %v1623 = vsub.f32 0.0, %v1591
        %v1624 = vsub.f32 0.0, %v1592
        %v1625 = vsub.f32 0.0, %v1593
        %v1626 = vsub.f32 0.0, %v1594
        %v1627 = vsub.f32 0.0, %v1595
        %v1628 = vsub.f32 0.0, %v1596
        %v1629 = vsub.f32 0.0, %v1597
        %v1630 = vsub.f32 0.0, %v1598
        %v1631 = vsub.f32 0.0, %v1599
        %v1632 = vsub.f32 0.0, %v1600
        %v1633 = vsub.f32 0.0, %v1601
        %v1634 = vsub.f32 0.0, %v1602
        %v1635 = vsub.f32 0.0, %v1603
        %v1636 = vsub.f32 0.0, %v1604
        %v1637 = vsub.f32 0.0, %v1605
        %v1638 = vsub.f32 0.0, %v1606
        %v1639 = vsub.f32 0.0, %v1607
        %v1640 = vsub.f32 0.0, %v1608
        %v1641 = vsub.f32 0.0, %v1609
        %v1642 = vsub.f32 0.0, %v1610
        %v1643 = vsub.f32 0.0, %v1611
        %v1644 = vsub.f32 0.0, %v1612
        %v1645 = vsub.f32 0.0, %v1613
        %v1646 = vsub.f32 0.0, %v1614
        %v1647 = vsub.f32 0.0, %v1615
        %v1648 = vsub.f32 0.0, %v1616
        %v1649 = vsub.f32 0.0, %v1617
        %v1650 = vmul.f32 %v1618, 1.442695
        %v1651 = vpow.pop %v1650
        %v1652 = vmul.f32 %v1619, 1.442695
        %v1653 = vpow.pop %v1652
        %v1654 = vmul.f32 %v1620, 1.442695
        %v1655 = vpow.pop %v1654
        %v1656 = vmul.f32 %v1621, 1.442695
        %v1657 = vpow.pop %v1656
        %v1658 = vmul.f32 %v1622, 1.442695
        %v1659 = vpow.pop %v1658
        %v1660 = vmul.f32 %v1623, 1.442695
        %v1661 = vpow.pop %v1660
        %v1662 = vmul.f32 %v1624, 1.442695
        %v1663 = vpow.pop %v1662
        %v1664 = vmul.f32 %v1625, 1.442695
        %v1665 = vpow.pop %v1664
        %v1666 = vmul.f32 %v1626, 1.442695
        %v1667 = vpow.pop %v1666
        %v1668 = vmul.f32 %v1627, 1.442695
        %v1669 = vpow.pop %v1668
        %v1670 = vmul.f32 %v1628, 1.442695
        %v1671 = vpow.pop %v1670
        %v1672 = vmul.f32 %v1629, 1.442695
        %v1673 = vpow.pop %v1672
        %v1674 = vmul.f32 %v1630, 1.442695
        %v1675 = vpow.pop %v1674
        %v1676 = vmul.f32 %v1631, 1.442695
        %v1677 = vpow.pop %v1676
        %v1678 = vmul.f32 %v1632, 1.442695
        %v1679 = vpow.pop %v1678
        %v1680 = vmul.f32 %v1633, 1.442695
        %v1681 = vpow.pop %v1680
        %v1682 = vmul.f32 %v1634, 1.442695
        %v1683 = vpow.pop %v1682
        %v1684 = vmul.f32 %v1635, 1.442695
        %v1685 = vpow.pop %v1684
        %v1686 = vmul.f32 %v1636, 1.442695
        %v1687 = vpow.pop %v1686
        %v1688 = vmul.f32 %v1637, 1.442695
        %v1689 = vpow.pop %v1688
        %v1690 = vmul.f32 %v1638, 1.442695
        %v1691 = vpow.pop %v1690
        %v1692 = vmul.f32 %v1639, 1.442695
        %v1693 = vpow.pop %v1692
        %v1694 = vmul.f32 %v1640, 1.442695
        %v1695 = vpow.pop %v1694
        %v1696 = vmul.f32 %v1641, 1.442695
        %v1697 = vpow.pop %v1696
        %v1698 = vmul.f32 %v1642, 1.442695
        %v1699 = vpow.pop %v1698
        %v1700 = vmul.f32 %v1643, 1.442695
        %v1701 = vpow.pop %v1700
        %v1702 = vmul.f32 %v1644, 1.442695
        %v1703 = vpow.pop %v1702
        %v1704 = vmul.f32 %v1645, 1.442695
        %v1705 = vpow.pop %v1704
        %v1706 = vmul.f32 %v1646, 1.442695
        %v1707 = vpow.pop %v1706
        %v1708 = vmul.f32 %v1647, 1.442695
        %v1709 = vpow.pop %v1708
        %v1710 = vmul.f32 %v1648, 1.442695
        %v1711 = vpow.pop %v1710
        %v1712 = vmul.f32 %v1649, 1.442695
        %v1713 = vpow.pop %v1712
        %v1714 = vadd.f32 %v1651, 1.0
        %v1715 = vadd.f32 %v1653, 1.0
        %v1716 = vadd.f32 %v1655, 1.0
        %v1717 = vadd.f32 %v1657, 1.0
        %v1718 = vadd.f32 %v1659, 1.0
        %v1719 = vadd.f32 %v1661, 1.0
        %v1720 = vadd.f32 %v1663, 1.0
        %v1721 = vadd.f32 %v1665, 1.0
        %v1722 = vadd.f32 %v1667, 1.0
        %v1723 = vadd.f32 %v1669, 1.0
        %v1724 = vadd.f32 %v1671, 1.0
        %v1725 = vadd.f32 %v1673, 1.0
        %v1726 = vadd.f32 %v1675, 1.0
        %v1727 = vadd.f32 %v1677, 1.0
        %v1728 = vadd.f32 %v1679, 1.0
        %v1729 = vadd.f32 %v1681, 1.0
        %v1730 = vadd.f32 %v1683, 1.0
        %v1731 = vadd.f32 %v1685, 1.0
        %v1732 = vadd.f32 %v1687, 1.0
        %v1733 = vadd.f32 %v1689, 1.0
        %v1734 = vadd.f32 %v1691, 1.0
        %v1735 = vadd.f32 %v1693, 1.0
        %v1736 = vadd.f32 %v1695, 1.0
        %v1737 = vadd.f32 %v1697, 1.0
        %v1738 = vadd.f32 %v1699, 1.0
        %v1739 = vadd.f32 %v1701, 1.0
        %v1740 = vadd.f32 %v1703, 1.0
        %v1741 = vadd.f32 %v1705, 1.0
        %v1742 = vadd.f32 %v1707, 1.0
        %v1743 = vadd.f32 %v1709, 1.0
        %v1744 = vadd.f32 %v1711, 1.0
        %v1745 = vadd.f32 %v1713, 1.0
        %v1746 = vrcp.pop %v1714
        %v1747 = vmul.f32 1.0, %v1746
        %v1748 = vrcp.pop %v1715
        %v1749 = vmul.f32 1.0, %v1748
        %v1750 = vrcp.pop %v1716
        %v1751 = vmul.f32 1.0, %v1750
        %v1752 = vrcp.pop %v1717
        %v1753 = vmul.f32 1.0, %v1752
        %v1754 = vrcp.pop %v1718
        %v1755 = vmul.f32 1.0, %v1754
        %v1756 = vrcp.pop %v1719
        %v1757 = vmul.f32 1.0, %v1756
        %v1758 = vrcp.pop %v1720
        %v1759 = vmul.f32 1.0, %v1758
        %v1760 = vrcp.pop %v1721
        %v1761 = vmul.f32 1.0, %v1760
        %v1762 = vrcp.pop %v1722
        %v1763 = vmul.f32 1.0, %v1762
        %v1764 = vrcp.pop %v1723
        %v1765 = vmul.f32 1.0, %v1764
        %v1766 = vrcp.pop %v1724
        %v1767 = vmul.f32 1.0, %v1766
        %v1768 = vrcp.pop %v1725
        %v1769 = vmul.f32 1.0, %v1768
        %v1770 = vrcp.pop %v1726
        %v1771 = vmul.f32 1.0, %v1770
        %v1772 = vrcp.pop %v1727
        %v1773 = vmul.f32 1.0, %v1772
        %v1774 = vrcp.pop %v1728
        %v1775 = vmul.f32 1.0, %v1774
        %v1776 = vrcp.pop %v1729
        %v1777 = vmul.f32 1.0, %v1776
        %v1778 = vrcp.pop %v1730
        %v1779 = vmul.f32 1.0, %v1778
        %v1780 = vrcp.pop %v1731
        %v1781 = vmul.f32 1.0, %v1780
        %v1782 = vrcp.pop %v1732
        %v1783 = vmul.f32 1.0, %v1782
        %v1784 = vrcp.pop %v1733
        %v1785 = vmul.f32 1.0, %v1784
        %v1786 = vrcp.pop %v1734
        %v1787 = vmul.f32 1.0, %v1786
        %v1788 = vrcp.pop %v1735
        %v1789 = vmul.f32 1.0, %v1788
        %v1790 = vrcp.pop %v1736
        %v1791 = vmul.f32 1.0, %v1790
        %v1792 = vrcp.pop %v1737
        %v1793 = vmul.f32 1.0, %v1792
        %v1794 = vrcp.pop %v1738
        %v1795 = vmul.f32 1.0, %v1794
        %v1796 = vrcp.pop %v1739
        %v1797 = vmul.f32 1.0, %v1796
        %v1798 = vrcp.pop %v1740
        %v1799 = vmul.f32 1.0, %v1798
        %v1800 = vrcp.pop %v1741
        %v1801 = vmul.f32 1.0, %v1800
        %v1802 = vrcp.pop %v1742
        %v1803 = vmul.f32 1.0, %v1802
        %v1804 = vrcp.pop %v1743
        %v1805 = vmul.f32 1.0, %v1804
        %v1806 = vrcp.pop %v1744
        %v1807 = vmul.f32 1.0, %v1806
        %v1808 = vrcp.pop %v1745
        %v1809 = vmul.f32 1.0, %v1808
        %v1842 = vlaneseq
        %v1843 = vand.u32 %v1842, 127
        %v1844 = vlaneseq
        %v1845 = vshrl.u32 %v1844, 7
        %v1846 = vsub.s32 %v1843, %v1845
        %v1847 = vrot.slane %v1747, %v1846
        %v1848 = vadd.s32 %v1843, 4294967288
        %v1849 = vlaneseq
        %v1850 = vshrl.u32 %v1849, 7
        %v1851 = vsub.s32 %v1848, %v1850
        %v1852 = vrot.slane %v1749, %v1851
        %vm1853 = vcmask 130112
        %v1854 = vsel %vm1853, %v1852, %v1847
        %v1855 = vlaneseq
        %v1856 = vshrl.u32 %v1855, 7
        %v1857 = vsub.s32 %v1843, %v1856
        %v1858 = vrot.slane %v1751, %v1857
        %v1859 = vlaneseq
        %v1860 = vshrl.u32 %v1859, 7
        %v1861 = vsub.s32 %v1848, %v1860
        %v1862 = vrot.slane %v1753, %v1861
        %v1863 = vsel %vm1853, %v1862, %v1858
        %v1864 = vlaneseq
        %v1865 = vshrl.u32 %v1864, 7
        %v1866 = vsub.s32 %v1843, %v1865
        %v1867 = vrot.slane %v1755, %v1866
        %v1868 = vlaneseq
        %v1869 = vshrl.u32 %v1868, 7
        %v1870 = vsub.s32 %v1848, %v1869
        %v1871 = vrot.slane %v1757, %v1870
        %v1872 = vsel %vm1853, %v1871, %v1867
        %v1873 = vlaneseq
        %v1874 = vshrl.u32 %v1873, 7
        %v1875 = vsub.s32 %v1843, %v1874
        %v1876 = vrot.slane %v1759, %v1875
        %v1877 = vlaneseq
        %v1878 = vshrl.u32 %v1877, 7
        %v1879 = vsub.s32 %v1848, %v1878
        %v1880 = vrot.slane %v1761, %v1879
        %v1881 = vsel %vm1853, %v1880, %v1876
        %v1882 = vlaneseq
        %v1883 = vshrl.u32 %v1882, 7
        %v1884 = vsub.s32 %v1843, %v1883
        %v1885 = vrot.slane %v1763, %v1884
        %v1886 = vlaneseq
        %v1887 = vshrl.u32 %v1886, 7
        %v1888 = vsub.s32 %v1848, %v1887
        %v1889 = vrot.slane %v1765, %v1888
        %v1890 = vsel %vm1853, %v1889, %v1885
        %v1891 = vlaneseq
        %v1892 = vshrl.u32 %v1891, 7
        %v1893 = vsub.s32 %v1843, %v1892
        %v1894 = vrot.slane %v1767, %v1893
        %v1895 = vlaneseq
        %v1896 = vshrl.u32 %v1895, 7
        %v1897 = vsub.s32 %v1848, %v1896
        %v1898 = vrot.slane %v1769, %v1897
        %v1899 = vsel %vm1853, %v1898, %v1894
        %v1900 = vlaneseq
        %v1901 = vshrl.u32 %v1900, 7
        %v1902 = vsub.s32 %v1843, %v1901
        %v1903 = vrot.slane %v1771, %v1902
        %v1904 = vlaneseq
        %v1905 = vshrl.u32 %v1904, 7
        %v1906 = vsub.s32 %v1848, %v1905
        %v1907 = vrot.slane %v1773, %v1906
        %v1908 = vsel %vm1853, %v1907, %v1903
        %v1909 = vlaneseq
        %v1910 = vshrl.u32 %v1909, 7
        %v1911 = vsub.s32 %v1843, %v1910
        %v1912 = vrot.slane %v1775, %v1911
        %v1913 = vlaneseq
        %v1914 = vshrl.u32 %v1913, 7
        %v1915 = vsub.s32 %v1848, %v1914
        %v1916 = vrot.slane %v1777, %v1915
        %v1917 = vsel %vm1853, %v1916, %v1912
        %v1918 = vlaneseq
        %v1919 = vshrl.u32 %v1918, 7
        %v1920 = vsub.s32 %v1843, %v1919
        %v1921 = vrot.slane %v1779, %v1920
        %v1922 = vlaneseq
        %v1923 = vshrl.u32 %v1922, 7
        %v1924 = vsub.s32 %v1848, %v1923
        %v1925 = vrot.slane %v1781, %v1924
        %v1926 = vsel %vm1853, %v1925, %v1921
        %v1927 = vlaneseq
        %v1928 = vshrl.u32 %v1927, 7
        %v1929 = vsub.s32 %v1843, %v1928
        %v1930 = vrot.slane %v1783, %v1929
        %v1931 = vlaneseq
        %v1932 = vshrl.u32 %v1931, 7
        %v1933 = vsub.s32 %v1848, %v1932
        %v1934 = vrot.slane %v1785, %v1933
        %v1935 = vsel %vm1853, %v1934, %v1930
        %v1936 = vlaneseq
        %v1937 = vshrl.u32 %v1936, 7
        %v1938 = vsub.s32 %v1843, %v1937
        %v1939 = vrot.slane %v1787, %v1938
        %v1940 = vlaneseq
        %v1941 = vshrl.u32 %v1940, 7
        %v1942 = vsub.s32 %v1848, %v1941
        %v1943 = vrot.slane %v1789, %v1942
        %v1944 = vsel %vm1853, %v1943, %v1939
        %v1945 = vlaneseq
        %v1946 = vshrl.u32 %v1945, 7
        %v1947 = vsub.s32 %v1843, %v1946
        %v1948 = vrot.slane %v1791, %v1947
        %v1949 = vlaneseq
        %v1950 = vshrl.u32 %v1949, 7
        %v1951 = vsub.s32 %v1848, %v1950
        %v1952 = vrot.slane %v1793, %v1951
        %v1953 = vsel %vm1853, %v1952, %v1948
        %v1954 = vlaneseq
        %v1955 = vshrl.u32 %v1954, 7
        %v1956 = vsub.s32 %v1843, %v1955
        %v1957 = vrot.slane %v1795, %v1956
        %v1958 = vlaneseq
        %v1959 = vshrl.u32 %v1958, 7
        %v1960 = vsub.s32 %v1848, %v1959
        %v1961 = vrot.slane %v1797, %v1960
        %v1962 = vsel %vm1853, %v1961, %v1957
        %v1963 = vlaneseq
        %v1964 = vshrl.u32 %v1963, 7
        %v1965 = vsub.s32 %v1843, %v1964
        %v1966 = vrot.slane %v1799, %v1965
        %v1967 = vlaneseq
        %v1968 = vshrl.u32 %v1967, 7
        %v1969 = vsub.s32 %v1848, %v1968
        %v1970 = vrot.slane %v1801, %v1969
        %v1971 = vsel %vm1853, %v1970, %v1966
        %v1972 = vlaneseq
        %v1973 = vshrl.u32 %v1972, 7
        %v1974 = vsub.s32 %v1843, %v1973
        %v1975 = vrot.slane %v1803, %v1974
        %v1976 = vlaneseq
        %v1977 = vshrl.u32 %v1976, 7
        %v1978 = vsub.s32 %v1848, %v1977
        %v1979 = vrot.slane %v1805, %v1978
        %v1980 = vsel %vm1853, %v1979, %v1975
        %v1981 = vlaneseq
        %v1982 = vshrl.u32 %v1981, 7
        %v1983 = vsub.s32 %v1843, %v1982
        %v1984 = vrot.slane %v1807, %v1983
        %v1985 = vlaneseq
        %v1986 = vshrl.u32 %v1985, 7
        %v1987 = vsub.s32 %v1848, %v1986
        %v1988 = vrot.slane %v1809, %v1987
        %v1989 = vsel %vm1853, %v1988, %v1984
        %vm1990 = vcmask 1041409
        %v1991 = vsel %vm1990, %v1863, %v1854
        %vm1992 = vcmask 1042434
        %v1993 = vsel %vm1992, %v1872, %v1991
        %vm1994 = vcmask 1043459
        %v1995 = vsel %vm1994, %v1881, %v1993
        %vm1996 = vcmask 1044484
        %v1997 = vsel %vm1996, %v1890, %v1995
        %vm1998 = vcmask 1045509
        %v1999 = vsel %vm1998, %v1899, %v1997
        %vm2000 = vcmask 1046534
        %v2001 = vsel %vm2000, %v1908, %v1999
        %vm2002 = vcmask 1047559
        %v2003 = vsel %vm2002, %v1917, %v2001
        %v2004 = vsel %vm1990, %v1935, %v1926
        %v2005 = vsel %vm1992, %v1944, %v2004
        %v2006 = vsel %vm1994, %v1953, %v2005
        %v2007 = vsel %vm1996, %v1962, %v2006
        %v2008 = vsel %vm1998, %v1971, %v2007
        %v2009 = vsel %vm2000, %v1980, %v2008
        %v2010 = vsel %vm2002, %v1989, %v2009
        %vm2013 = vcmask 130048
        %2014 = vst.msk [vmem:[%s248] sm:$0xff] %vm2013, %v2003
        %2015 = vst.msk [vmem:[%s248 + $0x8] sm:$0xff] %vm2013, %v2010
        %v2016 = vmul.f32 %v255, %v1747
        %v2017 = vmul.f32 %v256, %v1749
        %v2018 = vmul.f32 %v257, %v1751
        %v2019 = vmul.f32 %v258, %v1753
        %v2020 = vmul.f32 %v259, %v1755
        %v2021 = vmul.f32 %v260, %v1757
        %v2022 = vmul.f32 %v261, %v1759
        %v2023 = vmul.f32 %v262, %v1761
        %v2024 = vmul.f32 %v263, %v1763
        %v2025 = vmul.f32 %v264, %v1765
        %v2026 = vmul.f32 %v265, %v1767
        %v2027 = vmul.f32 %v266, %v1769
        %v2028 = vmul.f32 %v267, %v1771
        %v2029 = vmul.f32 %v268, %v1773
        %v2030 = vmul.f32 %v269, %v1775
        %v2031 = vmul.f32 %v270, %v1777
        %v2032 = vmul.f32 %v271, %v1779
        %v2033 = vmul.f32 %v272, %v1781
        %v2034 = vmul.f32 %v273, %v1783
        %v2035 = vmul.f32 %v274, %v1785
        %v2036 = vmul.f32 %v275, %v1787
        %v2037 = vmul.f32 %v276, %v1789
        %v2038 = vmul.f32 %v277, %v1791
        %v2039 = vmul.f32 %v278, %v1793
        %v2040 = vmul.f32 %v279, %v1795
        %v2041 = vmul.f32 %v280, %v1797
        %v2042 = vmul.f32 %v281, %v1799
        %v2043 = vmul.f32 %v282, %v1801
        %v2044 = vmul.f32 %v283, %v1803
        %v2045 = vmul.f32 %v284, %v1805
        %v2046 = vmul.f32 %v285, %v1807
        %v2047 = vmul.f32 %v286, %v1809
        %v2048 = vsel %vm287, %v2016, 0.0
        %v2049 = vsel %vm287, %v2018, 0.0
        %v2050 = vadd.f32 %v2048, %v2049
        %v2051 = vsel %vm287, %v2020, 0.0
        %v2052 = vadd.f32 %v2050, %v2051
        %v2053 = vsel %vm287, %v2022, 0.0
        %v2054 = vadd.f32 %v2052, %v2053
        %v2055 = vsel %vm287, %v2024, 0.0
        %v2056 = vadd.f32 %v2054, %v2055
        %v2057 = vsel %vm287, %v2026, 0.0
        %v2058 = vadd.f32 %v2056, %v2057
        %v2059 = vsel %vm287, %v2028, 0.0
        %v2060 = vadd.f32 %v2058, %v2059
        %v2061 = vsel %vm287, %v2030, 0.0
        %v2062 = vadd.f32 %v2060, %v2061
        %v2063 = vsel %vm287, %v2032, 0.0
        %v2064 = vadd.f32 %v2062, %v2063
        %v2065 = vsel %vm287, %v2034, 0.0
        %v2066 = vadd.f32 %v2064, %v2065
        %v2067 = vsel %vm287, %v2036, 0.0
        %v2068 = vadd.f32 %v2066, %v2067
        %v2069 = vsel %vm287, %v2038, 0.0
        %v2070 = vadd.f32 %v2068, %v2069
        %v2071 = vsel %vm287, %v2040, 0.0
        %v2072 = vadd.f32 %v2070, %v2071
        %v2073 = vsel %vm287, %v2042, 0.0
        %v2074 = vadd.f32 %v2072, %v2073
        %v2075 = vsel %vm287, %v2044, 0.0
        %v2076 = vadd.f32 %v2074, %v2075
        %v2077 = vsel %vm287, %v2046, 0.0
        %v2078 = vadd.f32 %v2076, %v2077
        %v2079 = vsel %vm287, %v2017, 0.0
        %v2080 = vsel %vm287, %v2019, 0.0
        %v2081 = vadd.f32 %v2079, %v2080
        %v2082 = vsel %vm287, %v2021, 0.0
        %v2083 = vadd.f32 %v2081, %v2082
        %v2084 = vsel %vm287, %v2023, 0.0
        %v2085 = vadd.f32 %v2083, %v2084
        %v2086 = vsel %vm287, %v2025, 0.0
        %v2087 = vadd.f32 %v2085, %v2086
        %v2088 = vsel %vm287, %v2027, 0.0
        %v2089 = vadd.f32 %v2087, %v2088
        %v2090 = vsel %vm287, %v2029, 0.0
        %v2091 = vadd.f32 %v2089, %v2090
        %v2092 = vsel %vm287, %v2031, 0.0
        %v2093 = vadd.f32 %v2091, %v2092
        %v2094 = vsel %vm287, %v2033, 0.0
        %v2095 = vadd.f32 %v2093, %v2094
        %v2096 = vsel %vm287, %v2035, 0.0
        %v2097 = vadd.f32 %v2095, %v2096
        %v2098 = vsel %vm287, %v2037, 0.0
        %v2099 = vadd.f32 %v2097, %v2098
        %v2100 = vsel %vm287, %v2039, 0.0
        %v2101 = vadd.f32 %v2099, %v2100
        %v2102 = vsel %vm287, %v2041, 0.0
        %v2103 = vadd.f32 %v2101, %v2102
        %v2104 = vsel %vm287, %v2043, 0.0
        %v2105 = vadd.f32 %v2103, %v2104
        %v2106 = vsel %vm287, %v2045, 0.0
        %v2107 = vadd.f32 %v2105, %v2106
        %v2108 = vsel %vm287, %v2047, 0.0
        %v2109 = vadd.f32 %v2107, %v2108
        %v2110 = vsel %vm287, %v2078, 0.0
        %v2111 = vsel %vm287, %v2109, 0.0
        %v2112 = vadd.f32 %v2110, %v2111
        %v2113 = vrot.slane %v2112, 4
        %v2114 = vadd.f32 %v2112, %v2113
        %v2115 = vrot.slane %v2114, 2
        %v2116 = vadd.f32 %v2114, %v2115
        %v2117 = vrot.slane %v2116, 1
        %v2118 = vadd.f32 %v2116, %v2117
        %v2119 = vmul.f32 %v2118, 0.00390625
        %2120 = vst.msk [vmem:[%s254] sm:$0x1] %vm1446, %v2119
        %s2121 = sand.u32 %s102, 1
        %s2122 = scalar_lea.sflag [#allocation5], %s2121
        %s2123 = sand.u32 %s102, 1
        %s2124 = smul.addr %s2123, 16
        %s2125 = scalar_lea.vmem [#allocation9], %s2124
        %s2126 = sand.u32 %s128, 1
        %s2127 = scalar_lea.sflag [#allocation11], %s2126
        %s2128 = sand.u32 %s128, 1
        %s2129 = scalar_lea.vmem [#allocation10], %s2128
        // Predicated region
        $region45: #{tpu_custom_call.1} parent=31 // pred_check
          %p2130 = pneg %p112
        $region46: #{tpu_custom_call.1} parent=31 // pred_check_branch
          %2132 = sbr.rel (%p2130) target = $region48
        $region47: #{tpu_custom_call.1} parent=31 // pred_region
          %s2134 = ssub.s32 256, 256
          %2135 = vsyncadd %s2122, %s2134
          %s2136 = smul.addr %s26, 2
          %s2137 = smul.addr %s2136, 128
          %s2138 = scalar_lea.hbm %s3, %s2137
          %s2139 = sshll.u32 %s2125, 4
          %s2140 = int_to_ptr.vmem [resolvable:$true] %s2139
          %2145 = dma.vmem_to_hbm [thread:$0]  %s2140, 256, %s2138, %s2122, 128, 128, 8
        $region48: #{tpu_custom_call.1} parent=31 // pred_fallthru
          _
        // Predicated region
        $region49: #{tpu_custom_call.1} parent=31 // pred_check
          %p2146 = pneg %p138
        $region50: #{tpu_custom_call.1} parent=31 // pred_check_branch
          %2148 = sbr.rel (%p2146) target = $region52
        $region51: #{tpu_custom_call.1} parent=31 // pred_region
          %s2150 = ssub.s32 16, 16
          %2151 = vsyncadd %s2127, %s2150
          %s2152 = smul.addr %s26, 16
          %s2153 = scalar_lea.hbm %s4, %s2152
          %s2155 = sshll.u32 %s2129, 4
          %s2156 = int_to_ptr.vmem [resolvable:$true] %s2155
          %2158 = dma.vmem_to_hbm [thread:$0]  %s2156, 16, %s2153, %s2127
        $region52: #{tpu_custom_call.1} parent=31 // pred_fallthru
          _
      $region32: #{tpu_custom_call.1} parent=5 // pred_fallthru
        _
      %p2159 = scmp.le.s32.totalorder 2, %s21
      // Predicated region
      $region53: #{tpu_custom_call.1} parent=5 // pred_check
        %p2160 = pneg %p2159
      $region54: #{tpu_custom_call.1} parent=5 // pred_check_branch
        %2162 = sbr.rel (%p2160) target = $region56
      $region55: #{tpu_custom_call.1} parent=5 // pred_region
        %s2163 = ssub.s32 %s21, 2
        // Predicated region
        $region57: #{tpu_custom_call.1} parent=55 // pred_check
          %p2164 = pneg %p118
        $region58: #{tpu_custom_call.1} parent=55 // pred_check_branch
          %2166 = sbr.rel (%p2164) target = $region60
        $region59: #{tpu_custom_call.1} parent=55 // pred_region
          %s2167 = sand.u32 %s103, 1
          %s2168 = scalar_lea.sflag [#allocation5], %s2167
          %s2169 = sand.u32 %s103, 1
          %s2170 = smul.addr %s2169, 16
          %s2171 = scalar_lea.vmem [#allocation9], %s2170
          %2172 = dma.done %s2168, 256
        $region60: #{tpu_custom_call.1} parent=55 // pred_fallthru
          _
        // Predicated region
        $region61: #{tpu_custom_call.1} parent=55 // pred_check
          %p2173 = pneg %p144
        $region62: #{tpu_custom_call.1} parent=55 // pred_check_branch
          %2175 = sbr.rel (%p2173) target = $region64
        $region63: #{tpu_custom_call.1} parent=55 // pred_region
          %s2176 = sand.u32 %s129, 1
          %s2177 = scalar_lea.sflag [#allocation11], %s2176
          %s2178 = sand.u32 %s129, 1
          %s2179 = scalar_lea.vmem [#allocation10], %s2178
          %2180 = dma.done %s2177, 16
        $region64: #{tpu_custom_call.1} parent=55 // pred_fallthru
          _
      $region56: #{tpu_custom_call.1} parent=5 // pred_fallthru
        _
    $region6: #{tpu_custom_call.1} parent=1 // loop_footer
      %s25 = sadd.s32 1, %s21
    $region7: #{tpu_custom_call.1} parent=1 // loop_footer_branch
      %20 = sbr.rel target = $region3
    $region8: #{tpu_custom_call.1} parent=1 // loop_exit
      _
    %2181 = vsyncpa [#allocation4], 1
    %s2182 = scalar_lea.sflag [#allocation4], 1
    %2183 = vsyncpa %s2182, 1
    %2184 = vsyncpa [#allocation7], 1
    %2185 = vsyncpa [#allocation5], 1
    %s2186 = scalar_lea.sflag [#allocation5], 1
    %2187 = vsyncpa %s2186, 1
    %2188 = vsyncpa [#allocation11], 1
    %s2189 = scalar_lea.sflag [#allocation11], 1
    %2190 = vsyncpa %s2189, 1

</llo_original>
